<compile_context>
chip_gen: v5e
topology: v5e:2x2
jax: 0.10.0
libtpu: 0.0.40
codegen_flags: <defaults>
</compile_context>

<pallas_src>
import functools

import jax
import jax.numpy as jnp
from jax.experimental import pallas as pl
from jax.experimental.pallas import tpu as pltpu

# ---- model config (small, consistent with the module's __init__) -------------
VOCAB_SIZE = 50
OUTPUT_SIZE = 1
EMBEDDING_DIM = 16
HIDDEN_DIM = 32
N_LAYERS = 2
BATCH = 2
SEQ_LEN = 8


def _round8(n):
    return (n + 7) // 8 * 8


# ---- Pallas kernel ------------------------------------------------------------
def sentiment_lstm_kernel(n_layers, hidden_dim, batch, seq_len, offs,
                          ids_ref, w_ref, state_ref, out_ref, state_out_ref):
    """Single-invocation kernel: in-kernel embedding gather + stacked-LSTM + fc + sigmoid.

    ids_ref:       (B, S) int32 token ids in SMEM.
    w_ref:         (ROWS, 4H) f32 packed weight slab in VMEM.  Sections (8-row aligned):
                     [0 : V]        gate table  = embedding @ W_ih0^T + b0
                     w_hh_0, then per layer l>=1: w_ih_l, w_hh_l, b_l, then fc row
                     (fc row = [w_fc (H values), b_fc, zeros]).
    state_ref:     (2L, B, H) f32: rows [0:L] = h0 per layer, [L:2L] = c0 per layer.
    out_ref:       (B, output_size) sigmoid(fc(h_last)).
    state_out_ref: (2L, B, H) final (h, c) -- aliased with state_ref's HBM buffer.
    """
    H = hidden_dim
    B, S = batch, seq_len

    # ---- hoisted weight loads: static, 8-row-aligned slices of the single slab ----
    w_hh0 = w_ref[offs["w_hh_0"]:offs["w_hh_0"] + H, :]
    w_ih, w_hh, bias = [], [], []
    for l in range(1, n_layers):
        o_ih, o_hh, o_b = offs[f"w_ih_{l}"], offs[f"w_hh_{l}"], offs[f"b_{l}"]
        w_ih.append(w_ref[o_ih:o_ih + H, :])
        w_hh.append(w_ref[o_hh:o_hh + H, :])
        bias.append(w_ref[o_b:o_b + 1, :])
    fc_row = w_ref[offs["fc"]:offs["fc"] + 1, :]

    # ---- in-kernel embedding gather on the folded gate table --------------------
    # Table lives at slab offset 0, so the token id indexes it directly.  One (1,4H)
    # dynamic-sublane row load per (b, t), stacked to (B, 4H); layer-0 x-projection
    # (and its bias) is therefore fully off the recurrent critical path.
    xproj = []
    for t in range(S):
        rows = [w_ref[pl.ds(ids_ref[b, t], 1), :] for b in range(B)]
        xproj.append(rows[0] if B == 1 else jnp.concatenate(rows, axis=0))

    # Recurrent state carried in vregs (Python-loop values), written back once at the end.
    h = [state_ref[l] for l in range(n_layers)]
    c = [state_ref[n_layers + l] for l in range(n_layers)]

    def cell(gates, c_prev):
        # Full-vreg activations: 2 EUP passes over (B, 4H), then per-gate lane slices.
        sig = jax.nn.sigmoid(gates)
        tnh = jnp.tanh(gates)
        i_g = sig[:, 0:H]
        f_g = sig[:, H:2 * H]
        g_g = tnh[:, 2 * H:3 * H]
        o_g = sig[:, 3 * H:4 * H]
        c_new = f_g * c_prev + i_g * g_g
        h_new = o_g * jnp.tanh(c_new)
        return h_new, c_new

    # Static unrolled time loop: no per-step grid / pipeline bookkeeping.
    # TODO(synk): switch to lax.fori_loop(..., unroll=True) if SEQ_LEN / N_LAYERS grow
    # enough for vreg pressure to matter (not at S=8, H=32).
    for t in range(S):
        # Layer 0: x-projection + bias already folded into the gathered table row.
        gates = xproj[t] + jnp.dot(h[0], w_hh0, preferred_element_type=jnp.float32)
        h[0], c[0] = cell(gates, c[0])
        x_t = h[0]
        # Layers >= 1: two small back-to-back MXU dots (no per-step lane concat).
        for l in range(1, n_layers):
            gates = (jnp.dot(x_t, w_ih[l - 1], preferred_element_type=jnp.float32)
                     + jnp.dot(h[l], w_hh[l - 1], preferred_element_type=jnp.float32)
                     + bias[l - 1])
            h[l], c[l] = cell(gates, c[l])
            x_t = h[l]

    # TODO(synk): inter-layer LSTM dropout (drop_prob) and nn.Dropout(0.3) are identity
    # in eval/inference mode; not applied here.
    # fc with output_size == 1: VPU mul + lane reduction instead of an N=1 MXU matmul.
    w_fc = fc_row[:, 0:H]                       # (1, H)
    b_fc = fc_row[:, H:H + 1]                   # (1, 1)
    logits = jnp.sum(h[-1] * w_fc, axis=-1, keepdims=True) + b_fc
    out_ref[...] = jax.nn.sigmoid(logits)       # (B, output_size)

    for l in range(n_layers):
        state_out_ref[l] = h[l]
        state_out_ref[n_layers + l] = c[l]


# ---- one-time weight prep: fold embedding + pack everything into one slab ------
def pack_params(params):
    """Builds the single (ROWS, 4H) f32 weight slab and its static row offsets."""
    assert OUTPUT_SIZE == 1
    H, G = HIDDEN_DIM, 4 * HIDDEN_DIM

    # Folded layer-0 gate table: embedding @ W_ih0^T + (b_ih0 + b_hh0).
    gate_table = jnp.dot(params["embedding"], params["w_ih_0"]) + params["b_0"]   # (V, 4H)
    # fc packed row: [w_fc (H values), b_fc, zeros up to 4H lanes].
    fc_row = jnp.concatenate(
        [params["wfc_T"].reshape(1, H), params["bfc"].reshape(1, 1),
         jnp.zeros((1, G - H - 1), jnp.float32)], axis=1)                          # (1, 4H)

    blocks, offs, row = [], {}, 0

    def add(name, arr):
        nonlocal row
        offs[name] = row
        pad = _round8(arr.shape[0]) - arr.shape[0]
        if pad:
            arr = jnp.pad(arr, ((0, pad), (0, 0)))
        blocks.append(arr.astype(jnp.float32))
        row += arr.shape[0]

    add("table", gate_table)                 # must stay at offset 0 (ids index it directly)
    add("w_hh_0", params["w_hh_0"])
    for l in range(1, N_LAYERS):
        add(f"w_ih_{l}", params[f"w_ih_{l}"])
        add(f"w_hh_{l}", params[f"w_hh_{l}"])
        add(f"b_{l}", params[f"b_{l}"])
    add("fc", fc_row)
    assert offs["table"] == 0

    return jnp.concatenate(blocks, axis=0), offs


# ---- wrapper -------------------------------------------------------------------
def sentiment_forward(x_ids, hidden, w_slab, offs):
    """Mirrors SentimentRNN.forward: returns (sig_out[:, -1], (h_n, c_n))."""
    h0, c0 = hidden
    B, S = x_ids.shape
    L, H = N_LAYERS, HIDDEN_DIM

    state_in = jnp.concatenate([h0, c0], axis=0)            # (2L, B, H)

    kernel = functools.partial(sentiment_lstm_kernel, L, H, B, S, offs)
    smem_spec = pl.BlockSpec(memory_space=pltpu.MemorySpace.SMEM)
    vmem_spec = pl.BlockSpec(memory_space=pltpu.MemorySpace.VMEM)

    sig_full, state_new = pl.pallas_call(
        kernel,
        out_shape=(jax.ShapeDtypeStruct((B, OUTPUT_SIZE), jnp.float32),
                   jax.ShapeDtypeStruct((2 * L, B, H), jnp.float32)),
        in_specs=[smem_spec, vmem_spec, vmem_spec],
        out_specs=(vmem_spec, vmem_spec),
        input_output_aliases={2: 1},                         # state_in aliases state_new
    )(x_ids.astype(jnp.int32), w_slab, state_in)

    # sig_out.view(batch, -1)[:, -1]  ==  sigmoid(fc(h_last))[:, output_size - 1]
    sig_out = sig_full[:, -1]
    return sig_out, (state_new[:L], state_new[L:])


# ---- pure-JAX reference (for correctness check) --------------------------------
def reference_forward(x_ids, hidden, params):
    h = [hidden[0][l] for l in range(N_LAYERS)]
    c = [hidden[1][l] for l in range(N_LAYERS)]
    embeds = jnp.take(params["embedding"], x_ids, axis=0).astype(jnp.float32)
    B, S, _ = embeds.shape
    H = HIDDEN_DIM
    for t in range(S):
        x_t = embeds[:, t, :]
        for l in range(N_LAYERS):
            gates = (x_t @ params[f"w_ih_{l}"] + h[l] @ params[f"w_hh_{l}"]
                     + params[f"b_{l}"])
            i_g = jax.nn.sigmoid(gates[:, 0:H])
            f_g = jax.nn.sigmoid(gates[:, H:2 * H])
            g_g = jnp.tanh(gates[:, 2 * H:3 * H])
            o_g = jax.nn.sigmoid(gates[:, 3 * H:4 * H])
            c[l] = f_g * c[l] + i_g * g_g
            h[l] = o_g * jnp.tanh(c[l])
            x_t = h[l]
    sig = jax.nn.sigmoid(h[-1] @ params["wfc_T"] + params["bfc"])
    return sig[:, -1], (jnp.stack(h), jnp.stack(c))


# ---- deterministic parameter init ----------------------------------------------
def init_params(key):
    keys = jax.random.split(key, 4 + 4 * N_LAYERS)
    scale = 1.0 / jnp.sqrt(jnp.float32(HIDDEN_DIM))
    params = {
        "embedding": jax.random.normal(keys[0], (VOCAB_SIZE, EMBEDDING_DIM),
                                       jnp.float32),
        "wfc_T": jax.random.uniform(keys[1], (HIDDEN_DIM, OUTPUT_SIZE),
                                    jnp.float32, -scale, scale),
        "bfc": jax.random.uniform(keys[2], (1, OUTPUT_SIZE),
                                  jnp.float32, -scale, scale),
    }
    for l in range(N_LAYERS):
        in_dim = EMBEDDING_DIM if l == 0 else HIDDEN_DIM
        k = keys[4 + 4 * l: 8 + 4 * l]
        # PyTorch stores (4H, in_dim)/(4H, H); we keep the transposed form for x @ W^T.
        params[f"w_ih_{l}"] = jax.random.uniform(
            k[0], (in_dim, 4 * HIDDEN_DIM), jnp.float32, -scale, scale)
        params[f"w_hh_{l}"] = jax.random.uniform(
            k[1], (HIDDEN_DIM, 4 * HIDDEN_DIM), jnp.float32, -scale, scale)
        b_ih = jax.random.uniform(k[2], (4 * HIDDEN_DIM,), jnp.float32,
                                  -scale, scale)
        b_hh = jax.random.uniform(k[3], (4 * HIDDEN_DIM,), jnp.float32,
                                  -scale, scale)
        params[f"b_{l}"] = (b_ih + b_hh).reshape(1, 4 * HIDDEN_DIM)
    return params


if __name__ == "__main__":
    root = jax.random.PRNGKey(0)
    k_param, k_x = jax.random.split(root)

    params = init_params(k_param)
    w_slab, offs = pack_params(params)     # one-time weight prep (fold + pack)

    x_ids = jax.random.randint(k_x, (BATCH, SEQ_LEN), 0, VOCAB_SIZE, jnp.int32)

    # init_hidden(batch_size): zeros (n_layers, batch, hidden) for h and c.
    h0 = jnp.zeros((N_LAYERS, BATCH, HIDDEN_DIM), jnp.float32)
    c0 = jnp.zeros((N_LAYERS, BATCH, HIDDEN_DIM), jnp.float32)

    sig_out, (hn, cn) = sentiment_forward(x_ids, (h0, c0), w_slab, offs)
    jax.block_until_ready((sig_out, hn, cn))

    ref_sig, (ref_hn, ref_cn) = reference_forward(x_ids, (h0, c0), params)
    assert sig_out.shape == (BATCH,)
    assert hn.shape == (N_LAYERS, BATCH, HIDDEN_DIM)
    assert cn.shape == (N_LAYERS, BATCH, HIDDEN_DIM)
    assert jnp.allclose(sig_out, ref_sig, atol=1e-4, rtol=1e-4)
    assert jnp.allclose(hn, ref_hn, atol=1e-4, rtol=1e-4)
    assert jnp.allclose(cn, ref_cn, atol=1e-4, rtol=1e-4)

    print("KERNEL_OK")
</pallas_src>

<mosaic_0001>
module attributes {stable_mosaic.version = 11 : i64} {
  func.func @sentiment_lstm_kernel(%arg0: memref<2x8xi32, #tpu.memory_space<smem>>, %arg1: memref<168x128xf32, #tpu.memory_space<vmem>>, %arg2: memref<4x2x32xf32, #tpu.memory_space<vmem>>, %arg3: memref<2x1xf32, #tpu.memory_space<vmem>>, %arg4: memref<4x2x32xf32, #tpu.memory_space<vmem>>) attributes {dimension_semantics = [], scalar_prefetch = 0 : i64, scratch_operands = 0 : i64, tpu.core_type = #tpu.core_type<tc>} {
    %c56 = arith.constant 56 : index
    %c0 = arith.constant 0 : index
    %0 = vector.load %arg1[%c56, %c0] : memref<168x128xf32, #tpu.memory_space<vmem>>, vector<32x128xf32>
    %c88 = arith.constant 88 : index
    %c0_0 = arith.constant 0 : index
    %1 = vector.load %arg1[%c88, %c0_0] : memref<168x128xf32, #tpu.memory_space<vmem>>, vector<32x128xf32>
    %c120 = arith.constant 120 : index
    %c0_1 = arith.constant 0 : index
    %2 = vector.load %arg1[%c120, %c0_1] : memref<168x128xf32, #tpu.memory_space<vmem>>, vector<32x128xf32>
    %c152 = arith.constant 152 : index
    %c0_2 = arith.constant 0 : index
    %3 = vector.load %arg1[%c152, %c0_2] : memref<168x128xf32, #tpu.memory_space<vmem>>, vector<1x128xf32>
    %c160 = arith.constant 160 : index
    %c0_3 = arith.constant 0 : index
    %4 = vector.load %arg1[%c160, %c0_3] : memref<168x128xf32, #tpu.memory_space<vmem>>, vector<1x128xf32>
    %c0_4 = arith.constant 0 : index
    %c0_5 = arith.constant 0 : index
    %5 = memref.load %arg0[%c0_4, %c0_5] : memref<2x8xi32, #tpu.memory_space<smem>>
    %6 = arith.index_cast %5 : i32 to index
    %c0_6 = arith.constant 0 : index
    %7 = vector.load %arg1[%6, %c0_6] : memref<168x128xf32, #tpu.memory_space<vmem>>, vector<1x128xf32>
    %c1 = arith.constant 1 : index
    %c0_7 = arith.constant 0 : index
    %8 = memref.load %arg0[%c1, %c0_7] : memref<2x8xi32, #tpu.memory_space<smem>>
    %9 = arith.index_cast %8 : i32 to index
    %c0_8 = arith.constant 0 : index
    %10 = vector.load %arg1[%9, %c0_8] : memref<168x128xf32, #tpu.memory_space<vmem>>, vector<1x128xf32>
    %11 = tpu.concatenate %7, %10 in 0 : vector<1x128xf32>, vector<1x128xf32> -> vector<2x128xf32>
    %c0_9 = arith.constant 0 : index
    %c1_10 = arith.constant 1 : index
    %12 = memref.load %arg0[%c0_9, %c1_10] : memref<2x8xi32, #tpu.memory_space<smem>>
    %13 = arith.index_cast %12 : i32 to index
    %c0_11 = arith.constant 0 : index
    %14 = vector.load %arg1[%13, %c0_11] : memref<168x128xf32, #tpu.memory_space<vmem>>, vector<1x128xf32>
    %c1_12 = arith.constant 1 : index
    %c1_13 = arith.constant 1 : index
    %15 = memref.load %arg0[%c1_12, %c1_13] : memref<2x8xi32, #tpu.memory_space<smem>>
    %16 = arith.index_cast %15 : i32 to index
    %c0_14 = arith.constant 0 : index
    %17 = vector.load %arg1[%16, %c0_14] : memref<168x128xf32, #tpu.memory_space<vmem>>, vector<1x128xf32>
    %18 = tpu.concatenate %14, %17 in 0 : vector<1x128xf32>, vector<1x128xf32> -> vector<2x128xf32>
    %c0_15 = arith.constant 0 : index
    %c2 = arith.constant 2 : index
    %19 = memref.load %arg0[%c0_15, %c2] : memref<2x8xi32, #tpu.memory_space<smem>>
    %20 = arith.index_cast %19 : i32 to index
    %c0_16 = arith.constant 0 : index
    %21 = vector.load %arg1[%20, %c0_16] : memref<168x128xf32, #tpu.memory_space<vmem>>, vector<1x128xf32>
    %c1_17 = arith.constant 1 : index
    %c2_18 = arith.constant 2 : index
    %22 = memref.load %arg0[%c1_17, %c2_18] : memref<2x8xi32, #tpu.memory_space<smem>>
    %23 = arith.index_cast %22 : i32 to index
    %c0_19 = arith.constant 0 : index
    %24 = vector.load %arg1[%23, %c0_19] : memref<168x128xf32, #tpu.memory_space<vmem>>, vector<1x128xf32>
    %25 = tpu.concatenate %21, %24 in 0 : vector<1x128xf32>, vector<1x128xf32> -> vector<2x128xf32>
    %c0_20 = arith.constant 0 : index
    %c3 = arith.constant 3 : index
    %26 = memref.load %arg0[%c0_20, %c3] : memref<2x8xi32, #tpu.memory_space<smem>>
    %27 = arith.index_cast %26 : i32 to index
    %c0_21 = arith.constant 0 : index
    %28 = vector.load %arg1[%27, %c0_21] : memref<168x128xf32, #tpu.memory_space<vmem>>, vector<1x128xf32>
    %c1_22 = arith.constant 1 : index
    %c3_23 = arith.constant 3 : index
    %29 = memref.load %arg0[%c1_22, %c3_23] : memref<2x8xi32, #tpu.memory_space<smem>>
    %30 = arith.index_cast %29 : i32 to index
    %c0_24 = arith.constant 0 : index
    %31 = vector.load %arg1[%30, %c0_24] : memref<168x128xf32, #tpu.memory_space<vmem>>, vector<1x128xf32>
    %32 = tpu.concatenate %28, %31 in 0 : vector<1x128xf32>, vector<1x128xf32> -> vector<2x128xf32>
    %c0_25 = arith.constant 0 : index
    %c4 = arith.constant 4 : index
    %33 = memref.load %arg0[%c0_25, %c4] : memref<2x8xi32, #tpu.memory_space<smem>>
    %34 = arith.index_cast %33 : i32 to index
    %c0_26 = arith.constant 0 : index
    %35 = vector.load %arg1[%34, %c0_26] : memref<168x128xf32, #tpu.memory_space<vmem>>, vector<1x128xf32>
    %c1_27 = arith.constant 1 : index
    %c4_28 = arith.constant 4 : index
    %36 = memref.load %arg0[%c1_27, %c4_28] : memref<2x8xi32, #tpu.memory_space<smem>>
    %37 = arith.index_cast %36 : i32 to index
    %c0_29 = arith.constant 0 : index
    %38 = vector.load %arg1[%37, %c0_29] : memref<168x128xf32, #tpu.memory_space<vmem>>, vector<1x128xf32>
    %39 = tpu.concatenate %35, %38 in 0 : vector<1x128xf32>, vector<1x128xf32> -> vector<2x128xf32>
    %c0_30 = arith.constant 0 : index
    %c5 = arith.constant 5 : index
    %40 = memref.load %arg0[%c0_30, %c5] : memref<2x8xi32, #tpu.memory_space<smem>>
    %41 = arith.index_cast %40 : i32 to index
    %c0_31 = arith.constant 0 : index
    %42 = vector.load %arg1[%41, %c0_31] : memref<168x128xf32, #tpu.memory_space<vmem>>, vector<1x128xf32>
    %c1_32 = arith.constant 1 : index
    %c5_33 = arith.constant 5 : index
    %43 = memref.load %arg0[%c1_32, %c5_33] : memref<2x8xi32, #tpu.memory_space<smem>>
    %44 = arith.index_cast %43 : i32 to index
    %c0_34 = arith.constant 0 : index
    %45 = vector.load %arg1[%44, %c0_34] : memref<168x128xf32, #tpu.memory_space<vmem>>, vector<1x128xf32>
    %46 = tpu.concatenate %42, %45 in 0 : vector<1x128xf32>, vector<1x128xf32> -> vector<2x128xf32>
    %c0_35 = arith.constant 0 : index
    %c6 = arith.constant 6 : index
    %47 = memref.load %arg0[%c0_35, %c6] : memref<2x8xi32, #tpu.memory_space<smem>>
    %48 = arith.index_cast %47 : i32 to index
    %c0_36 = arith.constant 0 : index
    %49 = vector.load %arg1[%48, %c0_36] : memref<168x128xf32, #tpu.memory_space<vmem>>, vector<1x128xf32>
    %c1_37 = arith.constant 1 : index
    %c6_38 = arith.constant 6 : index
    %50 = memref.load %arg0[%c1_37, %c6_38] : memref<2x8xi32, #tpu.memory_space<smem>>
    %51 = arith.index_cast %50 : i32 to index
    %c0_39 = arith.constant 0 : index
    %52 = vector.load %arg1[%51, %c0_39] : memref<168x128xf32, #tpu.memory_space<vmem>>, vector<1x128xf32>
    %53 = tpu.concatenate %49, %52 in 0 : vector<1x128xf32>, vector<1x128xf32> -> vector<2x128xf32>
    %c0_40 = arith.constant 0 : index
    %c7 = arith.constant 7 : index
    %54 = memref.load %arg0[%c0_40, %c7] : memref<2x8xi32, #tpu.memory_space<smem>>
    %55 = arith.index_cast %54 : i32 to index
    %c0_41 = arith.constant 0 : index
    %56 = vector.load %arg1[%55, %c0_41] : memref<168x128xf32, #tpu.memory_space<vmem>>, vector<1x128xf32>
    %c1_42 = arith.constant 1 : index
    %c7_43 = arith.constant 7 : index
    %57 = memref.load %arg0[%c1_42, %c7_43] : memref<2x8xi32, #tpu.memory_space<smem>>
    %58 = arith.index_cast %57 : i32 to index
    %c0_44 = arith.constant 0 : index
    %59 = vector.load %arg1[%58, %c0_44] : memref<168x128xf32, #tpu.memory_space<vmem>>, vector<1x128xf32>
    %60 = tpu.concatenate %56, %59 in 0 : vector<1x128xf32>, vector<1x128xf32> -> vector<2x128xf32>
    %c0_45 = arith.constant 0 : index
    %c0_46 = arith.constant 0 : index
    %c0_47 = arith.constant 0 : index
    %61 = vector.load %arg2[%c0_45, %c0_46, %c0_47] : memref<4x2x32xf32, #tpu.memory_space<vmem>>, vector<1x2x32xf32>
    %62 = vector.shape_cast %61 : vector<1x2x32xf32> to vector<2x32xf32>
    %c1_48 = arith.constant 1 : index
    %c0_49 = arith.constant 0 : index
    %c0_50 = arith.constant 0 : index
    %63 = vector.load %arg2[%c1_48, %c0_49, %c0_50] : memref<4x2x32xf32, #tpu.memory_space<vmem>>, vector<1x2x32xf32>
    %64 = vector.shape_cast %63 : vector<1x2x32xf32> to vector<2x32xf32>
    %c2_51 = arith.constant 2 : index
    %c0_52 = arith.constant 0 : index
    %c0_53 = arith.constant 0 : index
    %65 = vector.load %arg2[%c2_51, %c0_52, %c0_53] : memref<4x2x32xf32, #tpu.memory_space<vmem>>, vector<1x2x32xf32>
    %66 = vector.shape_cast %65 : vector<1x2x32xf32> to vector<2x32xf32>
    %c3_54 = arith.constant 3 : index
    %c0_55 = arith.constant 0 : index
    %c0_56 = arith.constant 0 : index
    %67 = vector.load %arg2[%c3_54, %c0_55, %c0_56] : memref<4x2x32xf32, #tpu.memory_space<vmem>>, vector<1x2x32xf32>
    %68 = vector.shape_cast %67 : vector<1x2x32xf32> to vector<2x32xf32>
    %cst = arith.constant dense<0.000000e+00> : vector<2x128xf32>
    %69 = tpu.matmul %62, %0, %cst {dimension_numbers = #tpu.dot_dimension_numbers<[1], [0], [0], [1], [0, 0, 1, 1], [], []>} : vector<2x32xf32>, vector<32x128xf32>, vector<2x128xf32> -> vector<2x128xf32>
    %70 = arith.addf %11, %69 : vector<2x128xf32>
    %71 = arith.negf %70 : vector<2x128xf32>
    %72 = math.exp %71 : vector<2x128xf32>
    %cst_57 = arith.constant 1.000000e+00 : f32
    %73 = vector.broadcast %cst_57 : f32 to vector<2x128xf32>
    %74 = arith.addf %73, %72 : vector<2x128xf32>
    %75 = arith.divf %73, %74 : vector<2x128xf32>
    %76 = math.tanh %70 : vector<2x128xf32>
    %77 = vector.extract_strided_slice %75 {offsets = [0, 0], sizes = [2, 32], strides = [1, 1]} : vector<2x128xf32> to vector<2x32xf32>
    %78 = vector.extract_strided_slice %75 {offsets = [0, 32], sizes = [2, 32], strides = [1, 1]} : vector<2x128xf32> to vector<2x32xf32>
    %79 = vector.extract_strided_slice %76 {offsets = [0, 64], sizes = [2, 32], strides = [1, 1]} : vector<2x128xf32> to vector<2x32xf32>
    %80 = vector.extract_strided_slice %75 {offsets = [0, 96], sizes = [2, 32], strides = [1, 1]} : vector<2x128xf32> to vector<2x32xf32>
    %81 = arith.mulf %78, %66 : vector<2x32xf32>
    %82 = arith.mulf %77, %79 : vector<2x32xf32>
    %83 = arith.addf %81, %82 : vector<2x32xf32>
    %84 = math.tanh %83 : vector<2x32xf32>
    %85 = arith.mulf %80, %84 : vector<2x32xf32>
    %cst_58 = arith.constant dense<0.000000e+00> : vector<2x128xf32>
    %86 = tpu.matmul %85, %1, %cst_58 {dimension_numbers = #tpu.dot_dimension_numbers<[1], [0], [0], [1], [0, 0, 1, 1], [], []>} : vector<2x32xf32>, vector<32x128xf32>, vector<2x128xf32> -> vector<2x128xf32>
    %cst_59 = arith.constant dense<0.000000e+00> : vector<2x128xf32>
    %87 = tpu.matmul %64, %2, %cst_59 {dimension_numbers = #tpu.dot_dimension_numbers<[1], [0], [0], [1], [0, 0, 1, 1], [], []>} : vector<2x32xf32>, vector<32x128xf32>, vector<2x128xf32> -> vector<2x128xf32>
    %88 = arith.addf %86, %87 : vector<2x128xf32>
    %89 = vector.broadcast %3 : vector<1x128xf32> to vector<2x128xf32>
    %90 = arith.addf %88, %89 : vector<2x128xf32>
    %91 = arith.negf %90 : vector<2x128xf32>
    %92 = math.exp %91 : vector<2x128xf32>
    %cst_60 = arith.constant 1.000000e+00 : f32
    %93 = vector.broadcast %cst_60 : f32 to vector<2x128xf32>
    %94 = arith.addf %93, %92 : vector<2x128xf32>
    %95 = arith.divf %93, %94 : vector<2x128xf32>
    %96 = math.tanh %90 : vector<2x128xf32>
    %97 = vector.extract_strided_slice %95 {offsets = [0, 0], sizes = [2, 32], strides = [1, 1]} : vector<2x128xf32> to vector<2x32xf32>
    %98 = vector.extract_strided_slice %95 {offsets = [0, 32], sizes = [2, 32], strides = [1, 1]} : vector<2x128xf32> to vector<2x32xf32>
    %99 = vector.extract_strided_slice %96 {offsets = [0, 64], sizes = [2, 32], strides = [1, 1]} : vector<2x128xf32> to vector<2x32xf32>
    %100 = vector.extract_strided_slice %95 {offsets = [0, 96], sizes = [2, 32], strides = [1, 1]} : vector<2x128xf32> to vector<2x32xf32>
    %101 = arith.mulf %98, %68 : vector<2x32xf32>
    %102 = arith.mulf %97, %99 : vector<2x32xf32>
    %103 = arith.addf %101, %102 : vector<2x32xf32>
    %104 = math.tanh %103 : vector<2x32xf32>
    %105 = arith.mulf %100, %104 : vector<2x32xf32>
    %cst_61 = arith.constant dense<0.000000e+00> : vector<2x128xf32>
    %106 = tpu.matmul %85, %0, %cst_61 {dimension_numbers = #tpu.dot_dimension_numbers<[1], [0], [0], [1], [0, 0, 1, 1], [], []>} : vector<2x32xf32>, vector<32x128xf32>, vector<2x128xf32> -> vector<2x128xf32>
    %107 = arith.addf %18, %106 : vector<2x128xf32>
    %108 = arith.negf %107 : vector<2x128xf32>
    %109 = math.exp %108 : vector<2x128xf32>
    %cst_62 = arith.constant 1.000000e+00 : f32
    %110 = vector.broadcast %cst_62 : f32 to vector<2x128xf32>
    %111 = arith.addf %110, %109 : vector<2x128xf32>
    %112 = arith.divf %110, %111 : vector<2x128xf32>
    %113 = math.tanh %107 : vector<2x128xf32>
    %114 = vector.extract_strided_slice %112 {offsets = [0, 0], sizes = [2, 32], strides = [1, 1]} : vector<2x128xf32> to vector<2x32xf32>
    %115 = vector.extract_strided_slice %112 {offsets = [0, 32], sizes = [2, 32], strides = [1, 1]} : vector<2x128xf32> to vector<2x32xf32>
    %116 = vector.extract_strided_slice %113 {offsets = [0, 64], sizes = [2, 32], strides = [1, 1]} : vector<2x128xf32> to vector<2x32xf32>
    %117 = vector.extract_strided_slice %112 {offsets = [0, 96], sizes = [2, 32], strides = [1, 1]} : vector<2x128xf32> to vector<2x32xf32>
    %118 = arith.mulf %115, %83 : vector<2x32xf32>
    %119 = arith.mulf %114, %116 : vector<2x32xf32>
    %120 = arith.addf %118, %119 : vector<2x32xf32>
    %121 = math.tanh %120 : vector<2x32xf32>
    %122 = arith.mulf %117, %121 : vector<2x32xf32>
    %cst_63 = arith.constant dense<0.000000e+00> : vector<2x128xf32>
    %123 = tpu.matmul %122, %1, %cst_63 {dimension_numbers = #tpu.dot_dimension_numbers<[1], [0], [0], [1], [0, 0, 1, 1], [], []>} : vector<2x32xf32>, vector<32x128xf32>, vector<2x128xf32> -> vector<2x128xf32>
    %cst_64 = arith.constant dense<0.000000e+00> : vector<2x128xf32>
    %124 = tpu.matmul %105, %2, %cst_64 {dimension_numbers = #tpu.dot_dimension_numbers<[1], [0], [0], [1], [0, 0, 1, 1], [], []>} : vector<2x32xf32>, vector<32x128xf32>, vector<2x128xf32> -> vector<2x128xf32>
    %125 = arith.addf %123, %124 : vector<2x128xf32>
    %126 = vector.broadcast %3 : vector<1x128xf32> to vector<2x128xf32>
    %127 = arith.addf %125, %126 : vector<2x128xf32>
    %128 = arith.negf %127 : vector<2x128xf32>
    %129 = math.exp %128 : vector<2x128xf32>
    %cst_65 = arith.constant 1.000000e+00 : f32
    %130 = vector.broadcast %cst_65 : f32 to vector<2x128xf32>
    %131 = arith.addf %130, %129 : vector<2x128xf32>
    %132 = arith.divf %130, %131 : vector<2x128xf32>
    %133 = math.tanh %127 : vector<2x128xf32>
    %134 = vector.extract_strided_slice %132 {offsets = [0, 0], sizes = [2, 32], strides = [1, 1]} : vector<2x128xf32> to vector<2x32xf32>
    %135 = vector.extract_strided_slice %132 {offsets = [0, 32], sizes = [2, 32], strides = [1, 1]} : vector<2x128xf32> to vector<2x32xf32>
    %136 = vector.extract_strided_slice %133 {offsets = [0, 64], sizes = [2, 32], strides = [1, 1]} : vector<2x128xf32> to vector<2x32xf32>
    %137 = vector.extract_strided_slice %132 {offsets = [0, 96], sizes = [2, 32], strides = [1, 1]} : vector<2x128xf32> to vector<2x32xf32>
    %138 = arith.mulf %135, %103 : vector<2x32xf32>
    %139 = arith.mulf %134, %136 : vector<2x32xf32>
    %140 = arith.addf %138, %139 : vector<2x32xf32>
    %141 = math.tanh %140 : vector<2x32xf32>
    %142 = arith.mulf %137, %141 : vector<2x32xf32>
    %cst_66 = arith.constant dense<0.000000e+00> : vector<2x128xf32>
    %143 = tpu.matmul %122, %0, %cst_66 {dimension_numbers = #tpu.dot_dimension_numbers<[1], [0], [0], [1], [0, 0, 1, 1], [], []>} : vector<2x32xf32>, vector<32x128xf32>, vector<2x128xf32> -> vector<2x128xf32>
    %144 = arith.addf %25, %143 : vector<2x128xf32>
    %145 = arith.negf %144 : vector<2x128xf32>
    %146 = math.exp %145 : vector<2x128xf32>
    %cst_67 = arith.constant 1.000000e+00 : f32
    %147 = vector.broadcast %cst_67 : f32 to vector<2x128xf32>
    %148 = arith.addf %147, %146 : vector<2x128xf32>
    %149 = arith.divf %147, %148 : vector<2x128xf32>
    %150 = math.tanh %144 : vector<2x128xf32>
    %151 = vector.extract_strided_slice %149 {offsets = [0, 0], sizes = [2, 32], strides = [1, 1]} : vector<2x128xf32> to vector<2x32xf32>
    %152 = vector.extract_strided_slice %149 {offsets = [0, 32], sizes = [2, 32], strides = [1, 1]} : vector<2x128xf32> to vector<2x32xf32>
    %153 = vector.extract_strided_slice %150 {offsets = [0, 64], sizes = [2, 32], strides = [1, 1]} : vector<2x128xf32> to vector<2x32xf32>
    %154 = vector.extract_strided_slice %149 {offsets = [0, 96], sizes = [2, 32], strides = [1, 1]} : vector<2x128xf32> to vector<2x32xf32>
    %155 = arith.mulf %152, %120 : vector<2x32xf32>
    %156 = arith.mulf %151, %153 : vector<2x32xf32>
    %157 = arith.addf %155, %156 : vector<2x32xf32>
    %158 = math.tanh %157 : vector<2x32xf32>
    %159 = arith.mulf %154, %158 : vector<2x32xf32>
    %cst_68 = arith.constant dense<0.000000e+00> : vector<2x128xf32>
    %160 = tpu.matmul %159, %1, %cst_68 {dimension_numbers = #tpu.dot_dimension_numbers<[1], [0], [0], [1], [0, 0, 1, 1], [], []>} : vector<2x32xf32>, vector<32x128xf32>, vector<2x128xf32> -> vector<2x128xf32>
    %cst_69 = arith.constant dense<0.000000e+00> : vector<2x128xf32>
    %161 = tpu.matmul %142, %2, %cst_69 {dimension_numbers = #tpu.dot_dimension_numbers<[1], [0], [0], [1], [0, 0, 1, 1], [], []>} : vector<2x32xf32>, vector<32x128xf32>, vector<2x128xf32> -> vector<2x128xf32>
    %162 = arith.addf %160, %161 : vector<2x128xf32>
    %163 = vector.broadcast %3 : vector<1x128xf32> to vector<2x128xf32>
    %164 = arith.addf %162, %163 : vector<2x128xf32>
    %165 = arith.negf %164 : vector<2x128xf32>
    %166 = math.exp %165 : vector<2x128xf32>
    %cst_70 = arith.constant 1.000000e+00 : f32
    %167 = vector.broadcast %cst_70 : f32 to vector<2x128xf32>
    %168 = arith.addf %167, %166 : vector<2x128xf32>
    %169 = arith.divf %167, %168 : vector<2x128xf32>
    %170 = math.tanh %164 : vector<2x128xf32>
    %171 = vector.extract_strided_slice %169 {offsets = [0, 0], sizes = [2, 32], strides = [1, 1]} : vector<2x128xf32> to vector<2x32xf32>
    %172 = vector.extract_strided_slice %169 {offsets = [0, 32], sizes = [2, 32], strides = [1, 1]} : vector<2x128xf32> to vector<2x32xf32>
    %173 = vector.extract_strided_slice %170 {offsets = [0, 64], sizes = [2, 32], strides = [1, 1]} : vector<2x128xf32> to vector<2x32xf32>
    %174 = vector.extract_strided_slice %169 {offsets = [0, 96], sizes = [2, 32], strides = [1, 1]} : vector<2x128xf32> to vector<2x32xf32>
    %175 = arith.mulf %172, %140 : vector<2x32xf32>
    %176 = arith.mulf %171, %173 : vector<2x32xf32>
    %177 = arith.addf %175, %176 : vector<2x32xf32>
    %178 = math.tanh %177 : vector<2x32xf32>
    %179 = arith.mulf %174, %178 : vector<2x32xf32>
    %cst_71 = arith.constant dense<0.000000e+00> : vector<2x128xf32>
    %180 = tpu.matmul %159, %0, %cst_71 {dimension_numbers = #tpu.dot_dimension_numbers<[1], [0], [0], [1], [0, 0, 1, 1], [], []>} : vector<2x32xf32>, vector<32x128xf32>, vector<2x128xf32> -> vector<2x128xf32>
    %181 = arith.addf %32, %180 : vector<2x128xf32>
    %182 = arith.negf %181 : vector<2x128xf32>
    %183 = math.exp %182 : vector<2x128xf32>
    %cst_72 = arith.constant 1.000000e+00 : f32
    %184 = vector.broadcast %cst_72 : f32 to vector<2x128xf32>
    %185 = arith.addf %184, %183 : vector<2x128xf32>
    %186 = arith.divf %184, %185 : vector<2x128xf32>
    %187 = math.tanh %181 : vector<2x128xf32>
    %188 = vector.extract_strided_slice %186 {offsets = [0, 0], sizes = [2, 32], strides = [1, 1]} : vector<2x128xf32> to vector<2x32xf32>
    %189 = vector.extract_strided_slice %186 {offsets = [0, 32], sizes = [2, 32], strides = [1, 1]} : vector<2x128xf32> to vector<2x32xf32>
    %190 = vector.extract_strided_slice %187 {offsets = [0, 64], sizes = [2, 32], strides = [1, 1]} : vector<2x128xf32> to vector<2x32xf32>
    %191 = vector.extract_strided_slice %186 {offsets = [0, 96], sizes = [2, 32], strides = [1, 1]} : vector<2x128xf32> to vector<2x32xf32>
    %192 = arith.mulf %189, %157 : vector<2x32xf32>
    %193 = arith.mulf %188, %190 : vector<2x32xf32>
    %194 = arith.addf %192, %193 : vector<2x32xf32>
    %195 = math.tanh %194 : vector<2x32xf32>
    %196 = arith.mulf %191, %195 : vector<2x32xf32>
    %cst_73 = arith.constant dense<0.000000e+00> : vector<2x128xf32>
    %197 = tpu.matmul %196, %1, %cst_73 {dimension_numbers = #tpu.dot_dimension_numbers<[1], [0], [0], [1], [0, 0, 1, 1], [], []>} : vector<2x32xf32>, vector<32x128xf32>, vector<2x128xf32> -> vector<2x128xf32>
    %cst_74 = arith.constant dense<0.000000e+00> : vector<2x128xf32>
    %198 = tpu.matmul %179, %2, %cst_74 {dimension_numbers = #tpu.dot_dimension_numbers<[1], [0], [0], [1], [0, 0, 1, 1], [], []>} : vector<2x32xf32>, vector<32x128xf32>, vector<2x128xf32> -> vector<2x128xf32>
    %199 = arith.addf %197, %198 : vector<2x128xf32>
    %200 = vector.broadcast %3 : vector<1x128xf32> to vector<2x128xf32>
    %201 = arith.addf %199, %200 : vector<2x128xf32>
    %202 = arith.negf %201 : vector<2x128xf32>
    %203 = math.exp %202 : vector<2x128xf32>
    %cst_75 = arith.constant 1.000000e+00 : f32
    %204 = vector.broadcast %cst_75 : f32 to vector<2x128xf32>
    %205 = arith.addf %204, %203 : vector<2x128xf32>
    %206 = arith.divf %204, %205 : vector<2x128xf32>
    %207 = math.tanh %201 : vector<2x128xf32>
    %208 = vector.extract_strided_slice %206 {offsets = [0, 0], sizes = [2, 32], strides = [1, 1]} : vector<2x128xf32> to vector<2x32xf32>
    %209 = vector.extract_strided_slice %206 {offsets = [0, 32], sizes = [2, 32], strides = [1, 1]} : vector<2x128xf32> to vector<2x32xf32>
    %210 = vector.extract_strided_slice %207 {offsets = [0, 64], sizes = [2, 32], strides = [1, 1]} : vector<2x128xf32> to vector<2x32xf32>
    %211 = vector.extract_strided_slice %206 {offsets = [0, 96], sizes = [2, 32], strides = [1, 1]} : vector<2x128xf32> to vector<2x32xf32>
    %212 = arith.mulf %209, %177 : vector<2x32xf32>
    %213 = arith.mulf %208, %210 : vector<2x32xf32>
    %214 = arith.addf %212, %213 : vector<2x32xf32>
    %215 = math.tanh %214 : vector<2x32xf32>
    %216 = arith.mulf %211, %215 : vector<2x32xf32>
    %cst_76 = arith.constant dense<0.000000e+00> : vector<2x128xf32>
    %217 = tpu.matmul %196, %0, %cst_76 {dimension_numbers = #tpu.dot_dimension_numbers<[1], [0], [0], [1], [0, 0, 1, 1], [], []>} : vector<2x32xf32>, vector<32x128xf32>, vector<2x128xf32> -> vector<2x128xf32>
    %218 = arith.addf %39, %217 : vector<2x128xf32>
    %219 = arith.negf %218 : vector<2x128xf32>
    %220 = math.exp %219 : vector<2x128xf32>
    %cst_77 = arith.constant 1.000000e+00 : f32
    %221 = vector.broadcast %cst_77 : f32 to vector<2x128xf32>
    %222 = arith.addf %221, %220 : vector<2x128xf32>
    %223 = arith.divf %221, %222 : vector<2x128xf32>
    %224 = math.tanh %218 : vector<2x128xf32>
    %225 = vector.extract_strided_slice %223 {offsets = [0, 0], sizes = [2, 32], strides = [1, 1]} : vector<2x128xf32> to vector<2x32xf32>
    %226 = vector.extract_strided_slice %223 {offsets = [0, 32], sizes = [2, 32], strides = [1, 1]} : vector<2x128xf32> to vector<2x32xf32>
    %227 = vector.extract_strided_slice %224 {offsets = [0, 64], sizes = [2, 32], strides = [1, 1]} : vector<2x128xf32> to vector<2x32xf32>
    %228 = vector.extract_strided_slice %223 {offsets = [0, 96], sizes = [2, 32], strides = [1, 1]} : vector<2x128xf32> to vector<2x32xf32>
    %229 = arith.mulf %226, %194 : vector<2x32xf32>
    %230 = arith.mulf %225, %227 : vector<2x32xf32>
    %231 = arith.addf %229, %230 : vector<2x32xf32>
    %232 = math.tanh %231 : vector<2x32xf32>
    %233 = arith.mulf %228, %232 : vector<2x32xf32>
    %cst_78 = arith.constant dense<0.000000e+00> : vector<2x128xf32>
    %234 = tpu.matmul %233, %1, %cst_78 {dimension_numbers = #tpu.dot_dimension_numbers<[1], [0], [0], [1], [0, 0, 1, 1], [], []>} : vector<2x32xf32>, vector<32x128xf32>, vector<2x128xf32> -> vector<2x128xf32>
    %cst_79 = arith.constant dense<0.000000e+00> : vector<2x128xf32>
    %235 = tpu.matmul %216, %2, %cst_79 {dimension_numbers = #tpu.dot_dimension_numbers<[1], [0], [0], [1], [0, 0, 1, 1], [], []>} : vector<2x32xf32>, vector<32x128xf32>, vector<2x128xf32> -> vector<2x128xf32>
    %236 = arith.addf %234, %235 : vector<2x128xf32>
    %237 = vector.broadcast %3 : vector<1x128xf32> to vector<2x128xf32>
    %238 = arith.addf %236, %237 : vector<2x128xf32>
    %239 = arith.negf %238 : vector<2x128xf32>
    %240 = math.exp %239 : vector<2x128xf32>
    %cst_80 = arith.constant 1.000000e+00 : f32
    %241 = vector.broadcast %cst_80 : f32 to vector<2x128xf32>
    %242 = arith.addf %241, %240 : vector<2x128xf32>
    %243 = arith.divf %241, %242 : vector<2x128xf32>
    %244 = math.tanh %238 : vector<2x128xf32>
    %245 = vector.extract_strided_slice %243 {offsets = [0, 0], sizes = [2, 32], strides = [1, 1]} : vector<2x128xf32> to vector<2x32xf32>
    %246 = vector.extract_strided_slice %243 {offsets = [0, 32], sizes = [2, 32], strides = [1, 1]} : vector<2x128xf32> to vector<2x32xf32>
    %247 = vector.extract_strided_slice %244 {offsets = [0, 64], sizes = [2, 32], strides = [1, 1]} : vector<2x128xf32> to vector<2x32xf32>
    %248 = vector.extract_strided_slice %243 {offsets = [0, 96], sizes = [2, 32], strides = [1, 1]} : vector<2x128xf32> to vector<2x32xf32>
    %249 = arith.mulf %246, %214 : vector<2x32xf32>
    %250 = arith.mulf %245, %247 : vector<2x32xf32>
    %251 = arith.addf %249, %250 : vector<2x32xf32>
    %252 = math.tanh %251 : vector<2x32xf32>
    %253 = arith.mulf %248, %252 : vector<2x32xf32>
    %cst_81 = arith.constant dense<0.000000e+00> : vector<2x128xf32>
    %254 = tpu.matmul %233, %0, %cst_81 {dimension_numbers = #tpu.dot_dimension_numbers<[1], [0], [0], [1], [0, 0, 1, 1], [], []>} : vector<2x32xf32>, vector<32x128xf32>, vector<2x128xf32> -> vector<2x128xf32>
    %255 = arith.addf %46, %254 : vector<2x128xf32>
    %256 = arith.negf %255 : vector<2x128xf32>
    %257 = math.exp %256 : vector<2x128xf32>
    %cst_82 = arith.constant 1.000000e+00 : f32
    %258 = vector.broadcast %cst_82 : f32 to vector<2x128xf32>
    %259 = arith.addf %258, %257 : vector<2x128xf32>
    %260 = arith.divf %258, %259 : vector<2x128xf32>
    %261 = math.tanh %255 : vector<2x128xf32>
    %262 = vector.extract_strided_slice %260 {offsets = [0, 0], sizes = [2, 32], strides = [1, 1]} : vector<2x128xf32> to vector<2x32xf32>
    %263 = vector.extract_strided_slice %260 {offsets = [0, 32], sizes = [2, 32], strides = [1, 1]} : vector<2x128xf32> to vector<2x32xf32>
    %264 = vector.extract_strided_slice %261 {offsets = [0, 64], sizes = [2, 32], strides = [1, 1]} : vector<2x128xf32> to vector<2x32xf32>
    %265 = vector.extract_strided_slice %260 {offsets = [0, 96], sizes = [2, 32], strides = [1, 1]} : vector<2x128xf32> to vector<2x32xf32>
    %266 = arith.mulf %263, %231 : vector<2x32xf32>
    %267 = arith.mulf %262, %264 : vector<2x32xf32>
    %268 = arith.addf %266, %267 : vector<2x32xf32>
    %269 = math.tanh %268 : vector<2x32xf32>
    %270 = arith.mulf %265, %269 : vector<2x32xf32>
    %cst_83 = arith.constant dense<0.000000e+00> : vector<2x128xf32>
    %271 = tpu.matmul %270, %1, %cst_83 {dimension_numbers = #tpu.dot_dimension_numbers<[1], [0], [0], [1], [0, 0, 1, 1], [], []>} : vector<2x32xf32>, vector<32x128xf32>, vector<2x128xf32> -> vector<2x128xf32>
    %cst_84 = arith.constant dense<0.000000e+00> : vector<2x128xf32>
    %272 = tpu.matmul %253, %2, %cst_84 {dimension_numbers = #tpu.dot_dimension_numbers<[1], [0], [0], [1], [0, 0, 1, 1], [], []>} : vector<2x32xf32>, vector<32x128xf32>, vector<2x128xf32> -> vector<2x128xf32>
    %273 = arith.addf %271, %272 : vector<2x128xf32>
    %274 = vector.broadcast %3 : vector<1x128xf32> to vector<2x128xf32>
    %275 = arith.addf %273, %274 : vector<2x128xf32>
    %276 = arith.negf %275 : vector<2x128xf32>
    %277 = math.exp %276 : vector<2x128xf32>
    %cst_85 = arith.constant 1.000000e+00 : f32
    %278 = vector.broadcast %cst_85 : f32 to vector<2x128xf32>
    %279 = arith.addf %278, %277 : vector<2x128xf32>
    %280 = arith.divf %278, %279 : vector<2x128xf32>
    %281 = math.tanh %275 : vector<2x128xf32>
    %282 = vector.extract_strided_slice %280 {offsets = [0, 0], sizes = [2, 32], strides = [1, 1]} : vector<2x128xf32> to vector<2x32xf32>
    %283 = vector.extract_strided_slice %280 {offsets = [0, 32], sizes = [2, 32], strides = [1, 1]} : vector<2x128xf32> to vector<2x32xf32>
    %284 = vector.extract_strided_slice %281 {offsets = [0, 64], sizes = [2, 32], strides = [1, 1]} : vector<2x128xf32> to vector<2x32xf32>
    %285 = vector.extract_strided_slice %280 {offsets = [0, 96], sizes = [2, 32], strides = [1, 1]} : vector<2x128xf32> to vector<2x32xf32>
    %286 = arith.mulf %283, %251 : vector<2x32xf32>
    %287 = arith.mulf %282, %284 : vector<2x32xf32>
    %288 = arith.addf %286, %287 : vector<2x32xf32>
    %289 = math.tanh %288 : vector<2x32xf32>
    %290 = arith.mulf %285, %289 : vector<2x32xf32>
    %cst_86 = arith.constant dense<0.000000e+00> : vector<2x128xf32>
    %291 = tpu.matmul %270, %0, %cst_86 {dimension_numbers = #tpu.dot_dimension_numbers<[1], [0], [0], [1], [0, 0, 1, 1], [], []>} : vector<2x32xf32>, vector<32x128xf32>, vector<2x128xf32> -> vector<2x128xf32>
    %292 = arith.addf %53, %291 : vector<2x128xf32>
    %293 = arith.negf %292 : vector<2x128xf32>
    %294 = math.exp %293 : vector<2x128xf32>
    %cst_87 = arith.constant 1.000000e+00 : f32
    %295 = vector.broadcast %cst_87 : f32 to vector<2x128xf32>
    %296 = arith.addf %295, %294 : vector<2x128xf32>
    %297 = arith.divf %295, %296 : vector<2x128xf32>
    %298 = math.tanh %292 : vector<2x128xf32>
    %299 = vector.extract_strided_slice %297 {offsets = [0, 0], sizes = [2, 32], strides = [1, 1]} : vector<2x128xf32> to vector<2x32xf32>
    %300 = vector.extract_strided_slice %297 {offsets = [0, 32], sizes = [2, 32], strides = [1, 1]} : vector<2x128xf32> to vector<2x32xf32>
    %301 = vector.extract_strided_slice %298 {offsets = [0, 64], sizes = [2, 32], strides = [1, 1]} : vector<2x128xf32> to vector<2x32xf32>
    %302 = vector.extract_strided_slice %297 {offsets = [0, 96], sizes = [2, 32], strides = [1, 1]} : vector<2x128xf32> to vector<2x32xf32>
    %303 = arith.mulf %300, %268 : vector<2x32xf32>
    %304 = arith.mulf %299, %301 : vector<2x32xf32>
    %305 = arith.addf %303, %304 : vector<2x32xf32>
    %306 = math.tanh %305 : vector<2x32xf32>
    %307 = arith.mulf %302, %306 : vector<2x32xf32>
    %cst_88 = arith.constant dense<0.000000e+00> : vector<2x128xf32>
    %308 = tpu.matmul %307, %1, %cst_88 {dimension_numbers = #tpu.dot_dimension_numbers<[1], [0], [0], [1], [0, 0, 1, 1], [], []>} : vector<2x32xf32>, vector<32x128xf32>, vector<2x128xf32> -> vector<2x128xf32>
    %cst_89 = arith.constant dense<0.000000e+00> : vector<2x128xf32>
    %309 = tpu.matmul %290, %2, %cst_89 {dimension_numbers = #tpu.dot_dimension_numbers<[1], [0], [0], [1], [0, 0, 1, 1], [], []>} : vector<2x32xf32>, vector<32x128xf32>, vector<2x128xf32> -> vector<2x128xf32>
    %310 = arith.addf %308, %309 : vector<2x128xf32>
    %311 = vector.broadcast %3 : vector<1x128xf32> to vector<2x128xf32>
    %312 = arith.addf %310, %311 : vector<2x128xf32>
    %313 = arith.negf %312 : vector<2x128xf32>
    %314 = math.exp %313 : vector<2x128xf32>
    %cst_90 = arith.constant 1.000000e+00 : f32
    %315 = vector.broadcast %cst_90 : f32 to vector<2x128xf32>
    %316 = arith.addf %315, %314 : vector<2x128xf32>
    %317 = arith.divf %315, %316 : vector<2x128xf32>
    %318 = math.tanh %312 : vector<2x128xf32>
    %319 = vector.extract_strided_slice %317 {offsets = [0, 0], sizes = [2, 32], strides = [1, 1]} : vector<2x128xf32> to vector<2x32xf32>
    %320 = vector.extract_strided_slice %317 {offsets = [0, 32], sizes = [2, 32], strides = [1, 1]} : vector<2x128xf32> to vector<2x32xf32>
    %321 = vector.extract_strided_slice %318 {offsets = [0, 64], sizes = [2, 32], strides = [1, 1]} : vector<2x128xf32> to vector<2x32xf32>
    %322 = vector.extract_strided_slice %317 {offsets = [0, 96], sizes = [2, 32], strides = [1, 1]} : vector<2x128xf32> to vector<2x32xf32>
    %323 = arith.mulf %320, %288 : vector<2x32xf32>
    %324 = arith.mulf %319, %321 : vector<2x32xf32>
    %325 = arith.addf %323, %324 : vector<2x32xf32>
    %326 = math.tanh %325 : vector<2x32xf32>
    %327 = arith.mulf %322, %326 : vector<2x32xf32>
    %cst_91 = arith.constant dense<0.000000e+00> : vector<2x128xf32>
    %328 = tpu.matmul %307, %0, %cst_91 {dimension_numbers = #tpu.dot_dimension_numbers<[1], [0], [0], [1], [0, 0, 1, 1], [], []>} : vector<2x32xf32>, vector<32x128xf32>, vector<2x128xf32> -> vector<2x128xf32>
    %329 = arith.addf %60, %328 : vector<2x128xf32>
    %330 = arith.negf %329 : vector<2x128xf32>
    %331 = math.exp %330 : vector<2x128xf32>
    %cst_92 = arith.constant 1.000000e+00 : f32
    %332 = vector.broadcast %cst_92 : f32 to vector<2x128xf32>
    %333 = arith.addf %332, %331 : vector<2x128xf32>
    %334 = arith.divf %332, %333 : vector<2x128xf32>
    %335 = math.tanh %329 : vector<2x128xf32>
    %336 = vector.extract_strided_slice %334 {offsets = [0, 0], sizes = [2, 32], strides = [1, 1]} : vector<2x128xf32> to vector<2x32xf32>
    %337 = vector.extract_strided_slice %334 {offsets = [0, 32], sizes = [2, 32], strides = [1, 1]} : vector<2x128xf32> to vector<2x32xf32>
    %338 = vector.extract_strided_slice %335 {offsets = [0, 64], sizes = [2, 32], strides = [1, 1]} : vector<2x128xf32> to vector<2x32xf32>
    %339 = vector.extract_strided_slice %334 {offsets = [0, 96], sizes = [2, 32], strides = [1, 1]} : vector<2x128xf32> to vector<2x32xf32>
    %340 = arith.mulf %337, %305 : vector<2x32xf32>
    %341 = arith.mulf %336, %338 : vector<2x32xf32>
    %342 = arith.addf %340, %341 : vector<2x32xf32>
    %343 = math.tanh %342 : vector<2x32xf32>
    %344 = arith.mulf %339, %343 : vector<2x32xf32>
    %cst_93 = arith.constant dense<0.000000e+00> : vector<2x128xf32>
    %345 = tpu.matmul %344, %1, %cst_93 {dimension_numbers = #tpu.dot_dimension_numbers<[1], [0], [0], [1], [0, 0, 1, 1], [], []>} : vector<2x32xf32>, vector<32x128xf32>, vector<2x128xf32> -> vector<2x128xf32>
    %cst_94 = arith.constant dense<0.000000e+00> : vector<2x128xf32>
    %346 = tpu.matmul %327, %2, %cst_94 {dimension_numbers = #tpu.dot_dimension_numbers<[1], [0], [0], [1], [0, 0, 1, 1], [], []>} : vector<2x32xf32>, vector<32x128xf32>, vector<2x128xf32> -> vector<2x128xf32>
    %347 = arith.addf %345, %346 : vector<2x128xf32>
    %348 = vector.broadcast %3 : vector<1x128xf32> to vector<2x128xf32>
    %349 = arith.addf %347, %348 : vector<2x128xf32>
    %350 = arith.negf %349 : vector<2x128xf32>
    %351 = math.exp %350 : vector<2x128xf32>
    %cst_95 = arith.constant 1.000000e+00 : f32
    %352 = vector.broadcast %cst_95 : f32 to vector<2x128xf32>
    %353 = arith.addf %352, %351 : vector<2x128xf32>
    %354 = arith.divf %352, %353 : vector<2x128xf32>
    %355 = math.tanh %349 : vector<2x128xf32>
    %356 = vector.extract_strided_slice %354 {offsets = [0, 0], sizes = [2, 32], strides = [1, 1]} : vector<2x128xf32> to vector<2x32xf32>
    %357 = vector.extract_strided_slice %354 {offsets = [0, 32], sizes = [2, 32], strides = [1, 1]} : vector<2x128xf32> to vector<2x32xf32>
    %358 = vector.extract_strided_slice %355 {offsets = [0, 64], sizes = [2, 32], strides = [1, 1]} : vector<2x128xf32> to vector<2x32xf32>
    %359 = vector.extract_strided_slice %354 {offsets = [0, 96], sizes = [2, 32], strides = [1, 1]} : vector<2x128xf32> to vector<2x32xf32>
    %360 = arith.mulf %357, %325 : vector<2x32xf32>
    %361 = arith.mulf %356, %358 : vector<2x32xf32>
    %362 = arith.addf %360, %361 : vector<2x32xf32>
    %363 = math.tanh %362 : vector<2x32xf32>
    %364 = arith.mulf %359, %363 : vector<2x32xf32>
    %365 = vector.extract_strided_slice %4 {offsets = [0, 0], sizes = [1, 32], strides = [1, 1]} : vector<1x128xf32> to vector<1x32xf32>
    %366 = vector.extract_strided_slice %4 {offsets = [0, 32], sizes = [1, 1], strides = [1, 1]} : vector<1x128xf32> to vector<1x1xf32>
    %367 = vector.broadcast %365 : vector<1x32xf32> to vector<2x32xf32>
    %368 = arith.mulf %364, %367 : vector<2x32xf32>
    %cst_96 = arith.constant dense<0.000000e+00> : vector<2xf32>
    %369 = vector.multi_reduction <add>, %368, %cst_96 [1] : vector<2x32xf32> to vector<2xf32>
    %370 = vector.shape_cast %369 : vector<2xf32> to vector<2x1xf32>
    %371 = vector.broadcast %366 : vector<1x1xf32> to vector<2x1xf32>
    %372 = arith.addf %370, %371 : vector<2x1xf32>
    %373 = arith.negf %372 : vector<2x1xf32>
    %374 = math.exp %373 : vector<2x1xf32>
    %cst_97 = arith.constant 1.000000e+00 : f32
    %375 = vector.broadcast %cst_97 : f32 to vector<2x1xf32>
    %376 = arith.addf %375, %374 : vector<2x1xf32>
    %377 = arith.divf %375, %376 : vector<2x1xf32>
    %c0_98 = arith.constant 0 : index
    %c0_99 = arith.constant 0 : index
    %378 = vector.load %arg3[%c0_98, %c0_99] : memref<2x1xf32, #tpu.memory_space<vmem>>, vector<2x1xf32>
    tpu.vector_store %arg3[%c0_98, %c0_99], %377 {strides = array<i32>} : memref<2x1xf32, #tpu.memory_space<vmem>>, vector<2x1xf32>,
    %c0_100 = arith.constant 0 : index
    %c0_101 = arith.constant 0 : index
    %c0_102 = arith.constant 0 : index
    %379 = vector.load %arg4[%c0_100, %c0_101, %c0_102] : memref<4x2x32xf32, #tpu.memory_space<vmem>>, vector<1x2x32xf32>
    %380 = vector.shape_cast %379 : vector<1x2x32xf32> to vector<2x32xf32>
    %381 = vector.shape_cast %344 : vector<2x32xf32> to vector<1x2x32xf32>
    tpu.vector_store %arg4[%c0_100, %c0_101, %c0_102], %381 {strides = array<i32>} : memref<4x2x32xf32, #tpu.memory_space<vmem>>, vector<1x2x32xf32>,
    %c2_103 = arith.constant 2 : index
    %c0_104 = arith.constant 0 : index
    %c0_105 = arith.constant 0 : index
    %382 = vector.load %arg4[%c2_103, %c0_104, %c0_105] : memref<4x2x32xf32, #tpu.memory_space<vmem>>, vector<1x2x32xf32>
    %383 = vector.shape_cast %382 : vector<1x2x32xf32> to vector<2x32xf32>
    %384 = vector.shape_cast %342 : vector<2x32xf32> to vector<1x2x32xf32>
    tpu.vector_store %arg4[%c2_103, %c0_104, %c0_105], %384 {strides = array<i32>} : memref<4x2x32xf32, #tpu.memory_space<vmem>>, vector<1x2x32xf32>,
    %c1_106 = arith.constant 1 : index
    %c0_107 = arith.constant 0 : index
    %c0_108 = arith.constant 0 : index
    %385 = vector.load %arg4[%c1_106, %c0_107, %c0_108] : memref<4x2x32xf32, #tpu.memory_space<vmem>>, vector<1x2x32xf32>
    %386 = vector.shape_cast %385 : vector<1x2x32xf32> to vector<2x32xf32>
    %387 = vector.shape_cast %364 : vector<2x32xf32> to vector<1x2x32xf32>
    tpu.vector_store %arg4[%c1_106, %c0_107, %c0_108], %387 {strides = array<i32>} : memref<4x2x32xf32, #tpu.memory_space<vmem>>, vector<1x2x32xf32>,
    %c3_109 = arith.constant 3 : index
    %c0_110 = arith.constant 0 : index
    %c0_111 = arith.constant 0 : index
    %388 = vector.load %arg4[%c3_109, %c0_110, %c0_111] : memref<4x2x32xf32, #tpu.memory_space<vmem>>, vector<1x2x32xf32>
    %389 = vector.shape_cast %388 : vector<1x2x32xf32> to vector<2x32xf32>
    %390 = vector.shape_cast %362 : vector<2x32xf32> to vector<1x2x32xf32>
    tpu.vector_store %arg4[%c3_109, %c0_110, %c0_111], %390 {strides = array<i32>} : memref<4x2x32xf32, #tpu.memory_space<vmem>>, vector<1x2x32xf32>,
    return
  }
}

</mosaic_0001>

<llo_original>
// kernel: tpu_custom_call.1
$region0: #{tpu_custom_call.1}
  #allocation0 [shape = 'u32[]', space=smem, size = 0x4, offset = 0x4, fixed_abs, tag = 'smem constant byte address 0x4 - core index']
  #allocation1 [shape = 'u32[72,128]{1,0:T(1,128)}', space=vmem, size = 0x9000, scoped, tag = 'internal scratch']
  %s0 = inlined_call_operand.vmem [shape: s32[2,8], index: 0, kind: input, shape index: {}]
  %s1 = inlined_call_operand.hbm [shape: f32[168,128], index: 1, kind: input, shape index: {}]
  %s2 = inlined_call_operand.vmem [shape: f32[4,2,32], index: 2, kind: input, shape index: {}, may-alias: {2,4}]
  %s3 = inlined_call_operand.vmem [shape: f32[2,1], index: 3, kind: output, shape index: {0}]
  %s4 = inlined_call_operand.vmem [shape: f32[4,2,32], index: 4, kind: output, shape index: {1}, may-alias: {2,4}]
  %5 = xla_tuple %s3, %s4
  %s6 = sld [smem:[#allocation0]]
  $region38: #{tpu_custom_call.1} parent=0
    _
  %s8 = ssub.s32 1, %s6
  %s9 = scalar_select 0, %s8, %s6
  $region1: #{tpu_custom_call.1} parent=0
    #allocation2 [shape = 'u8[1024]{0}', space=smem, size = 0x400, scoped, tag = 'input window, operand 0, single buffered']
    #allocation3 [shape = 's32[1]{0}', space=sflag, size = 0x4, scoped, tag = 'scoped memory for tpu_custom_call.1']
    #allocation4 [shape = 's32[1]{0}', space=sflag, size = 0x4, scoped, tag = 'scoped memory for tpu_custom_call.1']
    #allocation5 [shape = 'u8[86016]{0}', space=vmem, size = 0x15000, scoped, tag = 'input window, operand 1, single buffered']
    %10 = vsyncpa [#allocation4], 0
    %11 = vsyncpa [#allocation3], 0
    // Predicated region
    $region2: #{tpu_custom_call.1} parent=1 // pred_check
      _
    $region3: #{tpu_custom_call.1} parent=1 // pred_check_branch
      %13 = sbr.rel (0) target = $region5
    $region4: #{tpu_custom_call.1} parent=1 // pred_region
      %15 = vsyncadd [#allocation4], 0
      %s17 = sshll.u32 %s0, 4
      %s18 = int_to_ptr.vmem [resolvable:$true] %s17
      %20 = dma.vmem_to_smem %s18, 32, [#allocation2], [#allocation4]
    $region5: #{tpu_custom_call.1} parent=1 // pred_fallthru
      _
    // Predicated region
    $region6: #{tpu_custom_call.1} parent=1 // pred_check
      _
    $region7: #{tpu_custom_call.1} parent=1 // pred_check_branch
      %22 = sbr.rel (0) target = $region9
    $region8: #{tpu_custom_call.1} parent=1 // pred_region
      %24 = vsyncadd [#allocation3], 0
      %s25 = sshll.u32 %s1, 4
      %s26 = int_to_ptr.hbm [resolvable:$true] %s25
      %s27 = sshll.u32 [#allocation5], 4
      %s28 = int_to_ptr.vmem [resolvable:$true] %s27
      %33 = dma.hbm_to_vmem [thread:$0]  %s26, 2688, %s28, [#allocation3], 128, 128, 8
    $region9: #{tpu_custom_call.1} parent=1 // pred_fallthru
      _
    // Predicated region
    $region10: #{tpu_custom_call.1} parent=1 // pred_check
      _
    $region11: #{tpu_custom_call.1} parent=1 // pred_check_branch
      %35 = sbr.rel (0) target = $region13
    $region12: #{tpu_custom_call.1} parent=1 // pred_region
      _
    $region13: #{tpu_custom_call.1} parent=1 // pred_fallthru
      _
    // Predicated region
    $region14: #{tpu_custom_call.1} parent=1 // pred_check
      _
    $region15: #{tpu_custom_call.1} parent=1 // pred_check_branch
      %37 = sbr.rel (0) target = $region17
    $region16: #{tpu_custom_call.1} parent=1 // pred_region
      %39 = dma.done [#allocation4], 32
    $region17: #{tpu_custom_call.1} parent=1 // pred_fallthru
      _
    // Predicated region
    $region18: #{tpu_custom_call.1} parent=1 // pred_check
      _
    $region19: #{tpu_custom_call.1} parent=1 // pred_check_branch
      %41 = sbr.rel (0) target = $region21
    $region20: #{tpu_custom_call.1} parent=1 // pred_region
      %43 = dma.done [#allocation3], 2688
    $region21: #{tpu_custom_call.1} parent=1 // pred_fallthru
      _
    %44 = sfence
    %v45 = vld [vmem:[#allocation5 + $0x38] sm:$0xff]
    %v46 = vld [vmem:[#allocation5 + $0x40] sm:$0xff]
    %v47 = vld [vmem:[#allocation5 + $0x48] sm:$0xff]
    %v48 = vld [vmem:[#allocation5 + $0x50] sm:$0xff]
    %v49 = vld [vmem:[#allocation5 + $0x58] sm:$0xff]
    %v50 = vld [vmem:[#allocation5 + $0x60] sm:$0xff]
    %v51 = vld [vmem:[#allocation5 + $0x68] sm:$0xff]
    %v52 = vld [vmem:[#allocation5 + $0x70] sm:$0xff]
    %v53 = vld [vmem:[#allocation5 + $0x78] sm:$0xff]
    %v54 = vld [vmem:[#allocation5 + $0x80] sm:$0xff]
    %v55 = vld [vmem:[#allocation5 + $0x88] sm:$0xff]
    %v56 = vld [vmem:[#allocation5 + $0x90] sm:$0xff]
    %v57 = vld [vmem:[#allocation5 + $0x98] sm:$0x1]
    %v58 = vld [vmem:[#allocation5 + $0xa0] sm:$0x1]
    %s59 = sld [smem:[#allocation2]]
    %s60 = scalar_lea.vmem [#allocation5], %s59
    %v61 = vld [vmem:[%s60] sm:$0x1]
    %s62 = sld [smem:[#allocation2 + $0x80]]
    %s63 = scalar_lea.vmem [#allocation5], %s62
    %v64 = vld [vmem:[%s63] sm:$0x1]
    %v66 = vrot.slane %v64, 7
    %vm68 = vcmask 1040384
    %v69 = vsel %vm68, %v61, %v66
    %s70 = sld [smem:[#allocation2 + $0x1]]
    %s71 = scalar_lea.vmem [#allocation5], %s70
    %v72 = vld [vmem:[%s71] sm:$0x1]
    %s73 = sld [smem:[#allocation2 + $0x81]]
    %s74 = scalar_lea.vmem [#allocation5], %s73
    %v75 = vld [vmem:[%s74] sm:$0x1]
    %v77 = vrot.slane %v75, 7
    %v79 = vsel %vm68, %v72, %v77
    %s80 = sld [smem:[#allocation2 + $0x2]]
    %s81 = scalar_lea.vmem [#allocation5], %s80
    %v82 = vld [vmem:[%s81] sm:$0x1]
    %s83 = sld [smem:[#allocation2 + $0x82]]
    %s84 = scalar_lea.vmem [#allocation5], %s83
    %v85 = vld [vmem:[%s84] sm:$0x1]
    %v87 = vrot.slane %v85, 7
    %v89 = vsel %vm68, %v82, %v87
    %s90 = sld [smem:[#allocation2 + $0x3]]
    %s91 = scalar_lea.vmem [#allocation5], %s90
    %v92 = vld [vmem:[%s91] sm:$0x1]
    %s93 = sld [smem:[#allocation2 + $0x83]]
    %s94 = scalar_lea.vmem [#allocation5], %s93
    %v95 = vld [vmem:[%s94] sm:$0x1]
    %v97 = vrot.slane %v95, 7
    %v99 = vsel %vm68, %v92, %v97
    %s100 = sld [smem:[#allocation2 + $0x4]]
    %s101 = scalar_lea.vmem [#allocation5], %s100
    %v102 = vld [vmem:[%s101] sm:$0x1]
    %s103 = sld [smem:[#allocation2 + $0x84]]
    %s104 = scalar_lea.vmem [#allocation5], %s103
    %v105 = vld [vmem:[%s104] sm:$0x1]
    %v107 = vrot.slane %v105, 7
    %v109 = vsel %vm68, %v102, %v107
    %s110 = sld [smem:[#allocation2 + $0x5]]
    %s111 = scalar_lea.vmem [#allocation5], %s110
    %v112 = vld [vmem:[%s111] sm:$0x1]
    %s113 = sld [smem:[#allocation2 + $0x85]]
    %s114 = scalar_lea.vmem [#allocation5], %s113
    %v115 = vld [vmem:[%s114] sm:$0x1]
    %v117 = vrot.slane %v115, 7
    %v119 = vsel %vm68, %v112, %v117
    %s120 = sld [smem:[#allocation2 + $0x6]]
    %s121 = scalar_lea.vmem [#allocation5], %s120
    %v122 = vld [vmem:[%s121] sm:$0x1]
    %s123 = sld [smem:[#allocation2 + $0x86]]
    %s124 = scalar_lea.vmem [#allocation5], %s123
    %v125 = vld [vmem:[%s124] sm:$0x1]
    %v127 = vrot.slane %v125, 7
    %v129 = vsel %vm68, %v122, %v127
    %s130 = sld [smem:[#allocation2 + $0x7]]
    %s131 = scalar_lea.vmem [#allocation5], %s130
    %v132 = vld [vmem:[%s131] sm:$0x1]
    %s133 = sld [smem:[#allocation2 + $0x87]]
    %s134 = scalar_lea.vmem [#allocation5], %s133
    %v135 = vld [vmem:[%s134] sm:$0x1]
    %v137 = vrot.slane %v135, 7
    %v139 = vsel %vm68, %v132, %v137
    %v140 = vld [vmem:[%s2] sm:$0x3]
    %s141 = scalar_lea.vmem %s2, 2
    %v142 = vld [vmem:[%s141] sm:$0x3]
    %s143 = scalar_lea.vmem %s2, 4
    %v144 = vld [vmem:[%s143] sm:$0x3]
    %s145 = scalar_lea.vmem %s2, 6
    %v146 = vld [vmem:[%s145] sm:$0x3]
    %vm147 = vcmask 261120
    %v149 = vsel %vm147, %v140, 0
    %151 = vmatpush.msra.mxu0 0.0
    %152 = vmatpush.msra.mxu0 0.0
    %153 = vmatpush.msra.mxu0 0.0
    %154 = vmatpush.msra.mxu0 0.0
    %155 = vmatpush.msra.mxu0 0.0
    %156 = vmatpush.msra.mxu0 0.0
    %157 = vmatpush.msra.mxu0 0.0
    %158 = vmatpush.msra.mxu0 0.0
    %159 = vmatpush.msra.mxu0 0.0
    %160 = vmatpush.msra.mxu0 0.0
    %161 = vmatpush.msra.mxu0 0.0
    %162 = vmatpush.msra.mxu0 0.0
    %163 = vmatpush.msra.mxu0 %v48
    %164 = vmatpush.msra.mxu0 %v47
    %165 = vmatpush.msra.mxu0 %v46
    %166 = vmatpush.msra.mxu0 %v45
    %167 = vmatmul.f32.gmra.mxu0 %v149
    %v168 = vpop.f32.mrf.mxu0
    %v169 = vadd.f32 0.0, %v168
    %170 = vdwg.mxu0
    %v171 = vadd.f32 %v69, %v169
    %v172 = vxor.u32 %v171, 2147483648
    %v173 = vmul.f32 %v172, 1.442695
    %v174 = vpow.pop %v173
    %v175 = vadd.f32 %v174, 1.0
    %v176 = vrcp.pop %v175
    %v177 = vmul.f32 %v175, %v176
    %v178 = vsub.f32 1.0, %v177
    %v179 = vmul.f32 %v176, %v178
    %v180 = vadd.f32 %v176, %v179
    %vm181 = vweird.f32 %v175
    %vm182 = vweird.f32 %v176
    %vm183 = vmor %vm181, %vm182
    %v184 = vsel %vm183, %v176, %v180
    %v185 = vand.u32 2147483647, %v175
    %vm186 = vcmp.eq.f32.partialorder %v185, 8.507059e+37
    %v187 = vand.u32 %v175, 2147483648
    %v188 = vor.u32 1.1754944e-38, %v187
    %v189 = vsel %vm186, %v188, %v184
    %v190 = vmul.f32 1.0, %v189
    %v191 = vtanh.pop %v171
    %193 = vrot.lane.b32.xlu0 %v144, 32
    %v194 = vpop.permute.xlu0 %193
    %v196 = vmul.f32 %v190, %v194
    %198 = vrot.lane.b32.xlu0 %v191, 64
    %v199 = vpop.permute.xlu0 %198
    %v201 = vmul.f32 %v190, %v199
    %203 = vrot.lane.b32.xlu0 %v201, 32
    %v204 = vpop.permute.xlu0 %203
    %v206 = vadd.f32 %v196, %v204
    %v207 = vtanh.pop %v206
    %209 = vrot.lane.b32.xlu0 %v207, 64
    %v210 = vpop.permute.xlu0 %209
    %v212 = vmul.f32 %v190, %v210
    %v214 = vsel %vm147, %v142, 0
    %216 = vmatpush.msra.mxu0 0.0
    %217 = vmatpush.msra.mxu0 0.0
    %218 = vmatpush.msra.mxu0 0.0
    %219 = vmatpush.msra.mxu0 0.0
    %220 = vmatpush.msra.mxu0 0.0
    %221 = vmatpush.msra.mxu0 0.0
    %222 = vmatpush.msra.mxu0 0.0
    %223 = vmatpush.msra.mxu0 0.0
    %224 = vmatpush.msra.mxu0 0.0
    %225 = vmatpush.msra.mxu0 0.0
    %226 = vmatpush.msra.mxu0 0.0
    %227 = vmatpush.msra.mxu0 0.0
    %228 = vmatpush.msra.mxu0 %v56
    %229 = vmatpush.msra.mxu0 %v55
    %230 = vmatpush.msra.mxu0 %v54
    %231 = vmatpush.msra.mxu0 %v53
    %232 = vmatmul.f32.gmra.mxu0 %v214
    %v233 = vpop.f32.mrf.mxu0
    %v234 = vadd.f32 0.0, %v233
    %235 = vdwg.mxu0
    %237 = vrot.lane.b32.xlu0 %v212, 32
    %v238 = vpop.permute.xlu0 %237
    %v239 = vsel %vm147, %v238, 0
    %241 = vmatpush.msra.mxu0 0.0
    %242 = vmatpush.msra.mxu0 0.0
    %243 = vmatpush.msra.mxu0 0.0
    %244 = vmatpush.msra.mxu0 0.0
    %245 = vmatpush.msra.mxu0 0.0
    %246 = vmatpush.msra.mxu0 0.0
    %247 = vmatpush.msra.mxu0 0.0
    %248 = vmatpush.msra.mxu0 0.0
    %249 = vmatpush.msra.mxu0 0.0
    %250 = vmatpush.msra.mxu0 0.0
    %251 = vmatpush.msra.mxu0 0.0
    %252 = vmatpush.msra.mxu0 0.0
    %253 = vmatpush.msra.mxu0 %v52
    %254 = vmatpush.msra.mxu0 %v51
    %255 = vmatpush.msra.mxu0 %v50
    %256 = vmatpush.msra.mxu0 %v49
    %257 = vmatmul.f32.gmra.mxu0 %v239
    %v258 = vpop.f32.mrf.mxu0
    %v259 = vadd.f32 %v234, %v258
    %260 = vdwg.mxu0
    %v261 = vperm.slane %v57, 0
    %v262 = vadd.f32 %v259, %v261
    %v263 = vxor.u32 %v262, 2147483648
    %v264 = vmul.f32 %v263, 1.442695
    %v265 = vpow.pop %v264
    %v266 = vadd.f32 %v265, 1.0
    %v267 = vrcp.pop %v266
    %v268 = vmul.f32 %v266, %v267
    %v269 = vsub.f32 1.0, %v268
    %v270 = vmul.f32 %v267, %v269
    %v271 = vadd.f32 %v267, %v270
    %vm272 = vweird.f32 %v266
    %vm273 = vweird.f32 %v267
    %vm274 = vmor %vm272, %vm273
    %v275 = vsel %vm274, %v267, %v271
    %v276 = vand.u32 2147483647, %v266
    %vm277 = vcmp.eq.f32.partialorder %v276, 8.507059e+37
    %v278 = vand.u32 %v266, 2147483648
    %v279 = vor.u32 1.1754944e-38, %v278
    %v280 = vsel %vm277, %v279, %v275
    %v281 = vmul.f32 1.0, %v280
    %v282 = vtanh.pop %v262
    %284 = vrot.lane.b32.xlu0 %v146, 32
    %v285 = vpop.permute.xlu0 %284
    %v287 = vmul.f32 %v281, %v285
    %289 = vrot.lane.b32.xlu0 %v282, 64
    %v290 = vpop.permute.xlu0 %289
    %v292 = vmul.f32 %v281, %v290
    %294 = vrot.lane.b32.xlu0 %v292, 32
    %v295 = vpop.permute.xlu0 %294
    %v297 = vadd.f32 %v287, %v295
    %v298 = vtanh.pop %v297
    %300 = vrot.lane.b32.xlu0 %v298, 64
    %v301 = vpop.permute.xlu0 %300
    %v303 = vmul.f32 %v281, %v301
    %304 = vmatpush.msra.mxu0 0.0
    %305 = vmatpush.msra.mxu0 0.0
    %306 = vmatpush.msra.mxu0 0.0
    %307 = vmatpush.msra.mxu0 0.0
    %308 = vmatpush.msra.mxu0 0.0
    %309 = vmatpush.msra.mxu0 0.0
    %310 = vmatpush.msra.mxu0 0.0
    %311 = vmatpush.msra.mxu0 0.0
    %312 = vmatpush.msra.mxu0 0.0
    %313 = vmatpush.msra.mxu0 0.0
    %314 = vmatpush.msra.mxu0 0.0
    %315 = vmatpush.msra.mxu0 0.0
    %316 = vmatpush.msra.mxu0 %v48
    %317 = vmatpush.msra.mxu0 %v47
    %318 = vmatpush.msra.mxu0 %v46
    %319 = vmatpush.msra.mxu0 %v45
    %320 = vmatmul.f32.gmra.mxu0 %v239
    %v321 = vpop.f32.mrf.mxu0
    %v322 = vadd.f32 0.0, %v321
    %323 = vdwg.mxu0
    %v324 = vadd.f32 %v79, %v322
    %v325 = vxor.u32 %v324, 2147483648
    %v326 = vmul.f32 %v325, 1.442695
    %v327 = vpow.pop %v326
    %v328 = vadd.f32 %v327, 1.0
    %v329 = vrcp.pop %v328
    %v330 = vmul.f32 %v328, %v329
    %v331 = vsub.f32 1.0, %v330
    %v332 = vmul.f32 %v329, %v331
    %v333 = vadd.f32 %v329, %v332
    %vm334 = vweird.f32 %v328
    %vm335 = vweird.f32 %v329
    %vm336 = vmor %vm334, %vm335
    %v337 = vsel %vm336, %v329, %v333
    %v338 = vand.u32 2147483647, %v328
    %vm339 = vcmp.eq.f32.partialorder %v338, 8.507059e+37
    %v340 = vand.u32 %v328, 2147483648
    %v341 = vor.u32 1.1754944e-38, %v340
    %v342 = vsel %vm339, %v341, %v337
    %v343 = vmul.f32 1.0, %v342
    %v344 = vtanh.pop %v324
    %v345 = vmul.f32 %v343, %v206
    %347 = vrot.lane.b32.xlu0 %v344, 64
    %v348 = vpop.permute.xlu0 %347
    %v350 = vmul.f32 %v343, %v348
    %352 = vrot.lane.b32.xlu0 %v350, 32
    %v353 = vpop.permute.xlu0 %352
    %v355 = vadd.f32 %v345, %v353
    %v356 = vtanh.pop %v355
    %358 = vrot.lane.b32.xlu0 %v356, 64
    %v359 = vpop.permute.xlu0 %358
    %v361 = vmul.f32 %v343, %v359
    %363 = vrot.lane.b32.xlu0 %v303, 32
    %v364 = vpop.permute.xlu0 %363
    %v365 = vsel %vm147, %v364, 0
    %367 = vmatpush.msra.mxu0 0.0
    %368 = vmatpush.msra.mxu0 0.0
    %369 = vmatpush.msra.mxu0 0.0
    %370 = vmatpush.msra.mxu0 0.0
    %371 = vmatpush.msra.mxu0 0.0
    %372 = vmatpush.msra.mxu0 0.0
    %373 = vmatpush.msra.mxu0 0.0
    %374 = vmatpush.msra.mxu0 0.0
    %375 = vmatpush.msra.mxu0 0.0
    %376 = vmatpush.msra.mxu0 0.0
    %377 = vmatpush.msra.mxu0 0.0
    %378 = vmatpush.msra.mxu0 0.0
    %379 = vmatpush.msra.mxu0 %v56
    %380 = vmatpush.msra.mxu0 %v55
    %381 = vmatpush.msra.mxu0 %v54
    %382 = vmatpush.msra.mxu0 %v53
    %383 = vmatmul.f32.gmra.mxu0 %v365
    %v384 = vpop.f32.mrf.mxu0
    %v385 = vadd.f32 0.0, %v384
    %386 = vdwg.mxu0
    %388 = vrot.lane.b32.xlu0 %v361, 32
    %v389 = vpop.permute.xlu0 %388
    %v390 = vsel %vm147, %v389, 0
    %392 = vmatpush.msra.mxu0 0.0
    %393 = vmatpush.msra.mxu0 0.0
    %394 = vmatpush.msra.mxu0 0.0
    %395 = vmatpush.msra.mxu0 0.0
    %396 = vmatpush.msra.mxu0 0.0
    %397 = vmatpush.msra.mxu0 0.0
    %398 = vmatpush.msra.mxu0 0.0
    %399 = vmatpush.msra.mxu0 0.0
    %400 = vmatpush.msra.mxu0 0.0
    %401 = vmatpush.msra.mxu0 0.0
    %402 = vmatpush.msra.mxu0 0.0
    %403 = vmatpush.msra.mxu0 0.0
    %404 = vmatpush.msra.mxu0 %v52
    %405 = vmatpush.msra.mxu0 %v51
    %406 = vmatpush.msra.mxu0 %v50
    %407 = vmatpush.msra.mxu0 %v49
    %408 = vmatmul.f32.gmra.mxu0 %v390
    %v409 = vpop.f32.mrf.mxu0
    %v410 = vadd.f32 %v385, %v409
    %411 = vdwg.mxu0
    %v412 = vadd.f32 %v410, %v261
    %v413 = vxor.u32 %v412, 2147483648
    %v414 = vmul.f32 %v413, 1.442695
    %v415 = vpow.pop %v414
    %v416 = vadd.f32 %v415, 1.0
    %v417 = vrcp.pop %v416
    %v418 = vmul.f32 %v416, %v417
    %v419 = vsub.f32 1.0, %v418
    %v420 = vmul.f32 %v417, %v419
    %v421 = vadd.f32 %v417, %v420
    %vm422 = vweird.f32 %v416
    %vm423 = vweird.f32 %v417
    %vm424 = vmor %vm422, %vm423
    %v425 = vsel %vm424, %v417, %v421
    %v426 = vand.u32 2147483647, %v416
    %vm427 = vcmp.eq.f32.partialorder %v426, 8.507059e+37
    %v428 = vand.u32 %v416, 2147483648
    %v429 = vor.u32 1.1754944e-38, %v428
    %v430 = vsel %vm427, %v429, %v425
    %v431 = vmul.f32 1.0, %v430
    %v432 = vtanh.pop %v412
    %v433 = vmul.f32 %v431, %v297
    %435 = vrot.lane.b32.xlu0 %v432, 64
    %v436 = vpop.permute.xlu0 %435
    %v438 = vmul.f32 %v431, %v436
    %440 = vrot.lane.b32.xlu0 %v438, 32
    %v441 = vpop.permute.xlu0 %440
    %v443 = vadd.f32 %v433, %v441
    %v444 = vtanh.pop %v443
    %446 = vrot.lane.b32.xlu0 %v444, 64
    %v447 = vpop.permute.xlu0 %446
    %v449 = vmul.f32 %v431, %v447
    %450 = vmatpush.msra.mxu0 0.0
    %451 = vmatpush.msra.mxu0 0.0
    %452 = vmatpush.msra.mxu0 0.0
    %453 = vmatpush.msra.mxu0 0.0
    %454 = vmatpush.msra.mxu0 0.0
    %455 = vmatpush.msra.mxu0 0.0
    %456 = vmatpush.msra.mxu0 0.0
    %457 = vmatpush.msra.mxu0 0.0
    %458 = vmatpush.msra.mxu0 0.0
    %459 = vmatpush.msra.mxu0 0.0
    %460 = vmatpush.msra.mxu0 0.0
    %461 = vmatpush.msra.mxu0 0.0
    %462 = vmatpush.msra.mxu0 %v48
    %463 = vmatpush.msra.mxu0 %v47
    %464 = vmatpush.msra.mxu0 %v46
    %465 = vmatpush.msra.mxu0 %v45
    %466 = vmatmul.f32.gmra.mxu0 %v390
    %v467 = vpop.f32.mrf.mxu0
    %v468 = vadd.f32 0.0, %v467
    %469 = vdwg.mxu0
    %v470 = vadd.f32 %v89, %v468
    %v471 = vxor.u32 %v470, 2147483648
    %v472 = vmul.f32 %v471, 1.442695
    %v473 = vpow.pop %v472
    %v474 = vadd.f32 %v473, 1.0
    %v475 = vrcp.pop %v474
    %v476 = vmul.f32 %v474, %v475
    %v477 = vsub.f32 1.0, %v476
    %v478 = vmul.f32 %v475, %v477
    %v479 = vadd.f32 %v475, %v478
    %vm480 = vweird.f32 %v474
    %vm481 = vweird.f32 %v475
    %vm482 = vmor %vm480, %vm481
    %v483 = vsel %vm482, %v475, %v479
    %v484 = vand.u32 2147483647, %v474
    %vm485 = vcmp.eq.f32.partialorder %v484, 8.507059e+37
    %v486 = vand.u32 %v474, 2147483648
    %v487 = vor.u32 1.1754944e-38, %v486
    %v488 = vsel %vm485, %v487, %v483
    %v489 = vmul.f32 1.0, %v488
    %v490 = vtanh.pop %v470
    %v491 = vmul.f32 %v489, %v355
    %493 = vrot.lane.b32.xlu0 %v490, 64
    %v494 = vpop.permute.xlu0 %493
    %v496 = vmul.f32 %v489, %v494
    %498 = vrot.lane.b32.xlu0 %v496, 32
    %v499 = vpop.permute.xlu0 %498
    %v501 = vadd.f32 %v491, %v499
    %v502 = vtanh.pop %v501
    %504 = vrot.lane.b32.xlu0 %v502, 64
    %v505 = vpop.permute.xlu0 %504
    %v507 = vmul.f32 %v489, %v505
    %509 = vrot.lane.b32.xlu0 %v449, 32
    %v510 = vpop.permute.xlu0 %509
    %v511 = vsel %vm147, %v510, 0
    %513 = vmatpush.msra.mxu0 0.0
    %514 = vmatpush.msra.mxu0 0.0
    %515 = vmatpush.msra.mxu0 0.0
    %516 = vmatpush.msra.mxu0 0.0
    %517 = vmatpush.msra.mxu0 0.0
    %518 = vmatpush.msra.mxu0 0.0
    %519 = vmatpush.msra.mxu0 0.0
    %520 = vmatpush.msra.mxu0 0.0
    %521 = vmatpush.msra.mxu0 0.0
    %522 = vmatpush.msra.mxu0 0.0
    %523 = vmatpush.msra.mxu0 0.0
    %524 = vmatpush.msra.mxu0 0.0
    %525 = vmatpush.msra.mxu0 %v56
    %526 = vmatpush.msra.mxu0 %v55
    %527 = vmatpush.msra.mxu0 %v54
    %528 = vmatpush.msra.mxu0 %v53
    %529 = vmatmul.f32.gmra.mxu0 %v511
    %v530 = vpop.f32.mrf.mxu0
    %v531 = vadd.f32 0.0, %v530
    %532 = vdwg.mxu0
    %534 = vrot.lane.b32.xlu0 %v507, 32
    %v535 = vpop.permute.xlu0 %534
    %v536 = vsel %vm147, %v535, 0
    %538 = vmatpush.msra.mxu0 0.0
    %539 = vmatpush.msra.mxu0 0.0
    %540 = vmatpush.msra.mxu0 0.0
    %541 = vmatpush.msra.mxu0 0.0
    %542 = vmatpush.msra.mxu0 0.0
    %543 = vmatpush.msra.mxu0 0.0
    %544 = vmatpush.msra.mxu0 0.0
    %545 = vmatpush.msra.mxu0 0.0
    %546 = vmatpush.msra.mxu0 0.0
    %547 = vmatpush.msra.mxu0 0.0
    %548 = vmatpush.msra.mxu0 0.0
    %549 = vmatpush.msra.mxu0 0.0
    %550 = vmatpush.msra.mxu0 %v52
    %551 = vmatpush.msra.mxu0 %v51
    %552 = vmatpush.msra.mxu0 %v50
    %553 = vmatpush.msra.mxu0 %v49
    %554 = vmatmul.f32.gmra.mxu0 %v536
    %v555 = vpop.f32.mrf.mxu0
    %v556 = vadd.f32 %v531, %v555
    %557 = vdwg.mxu0
    %v558 = vadd.f32 %v556, %v261
    %v559 = vxor.u32 %v558, 2147483648
    %v560 = vmul.f32 %v559, 1.442695
    %v561 = vpow.pop %v560
    %v562 = vadd.f32 %v561, 1.0
    %v563 = vrcp.pop %v562
    %v564 = vmul.f32 %v562, %v563
    %v565 = vsub.f32 1.0, %v564
    %v566 = vmul.f32 %v563, %v565
    %v567 = vadd.f32 %v563, %v566
    %vm568 = vweird.f32 %v562
    %vm569 = vweird.f32 %v563
    %vm570 = vmor %vm568, %vm569
    %v571 = vsel %vm570, %v563, %v567
    %v572 = vand.u32 2147483647, %v562
    %vm573 = vcmp.eq.f32.partialorder %v572, 8.507059e+37
    %v574 = vand.u32 %v562, 2147483648
    %v575 = vor.u32 1.1754944e-38, %v574
    %v576 = vsel %vm573, %v575, %v571
    %v577 = vmul.f32 1.0, %v576
    %v578 = vtanh.pop %v558
    %v579 = vmul.f32 %v577, %v443
    %581 = vrot.lane.b32.xlu0 %v578, 64
    %v582 = vpop.permute.xlu0 %581
    %v584 = vmul.f32 %v577, %v582
    %586 = vrot.lane.b32.xlu0 %v584, 32
    %v587 = vpop.permute.xlu0 %586
    %v589 = vadd.f32 %v579, %v587
    %v590 = vtanh.pop %v589
    %592 = vrot.lane.b32.xlu0 %v590, 64
    %v593 = vpop.permute.xlu0 %592
    %v595 = vmul.f32 %v577, %v593
    %596 = vmatpush.msra.mxu0 0.0
    %597 = vmatpush.msra.mxu0 0.0
    %598 = vmatpush.msra.mxu0 0.0
    %599 = vmatpush.msra.mxu0 0.0
    %600 = vmatpush.msra.mxu0 0.0
    %601 = vmatpush.msra.mxu0 0.0
    %602 = vmatpush.msra.mxu0 0.0
    %603 = vmatpush.msra.mxu0 0.0
    %604 = vmatpush.msra.mxu0 0.0
    %605 = vmatpush.msra.mxu0 0.0
    %606 = vmatpush.msra.mxu0 0.0
    %607 = vmatpush.msra.mxu0 0.0
    %608 = vmatpush.msra.mxu0 %v48
    %609 = vmatpush.msra.mxu0 %v47
    %610 = vmatpush.msra.mxu0 %v46
    %611 = vmatpush.msra.mxu0 %v45
    %612 = vmatmul.f32.gmra.mxu0 %v536
    %v613 = vpop.f32.mrf.mxu0
    %v614 = vadd.f32 0.0, %v613
    %615 = vdwg.mxu0
    %v616 = vadd.f32 %v99, %v614
    %v617 = vxor.u32 %v616, 2147483648
    %v618 = vmul.f32 %v617, 1.442695
    %v619 = vpow.pop %v618
    %v620 = vadd.f32 %v619, 1.0
    %v621 = vrcp.pop %v620
    %v622 = vmul.f32 %v620, %v621
    %v623 = vsub.f32 1.0, %v622
    %v624 = vmul.f32 %v621, %v623
    %v625 = vadd.f32 %v621, %v624
    %vm626 = vweird.f32 %v620
    %vm627 = vweird.f32 %v621
    %vm628 = vmor %vm626, %vm627
    %v629 = vsel %vm628, %v621, %v625
    %v630 = vand.u32 2147483647, %v620
    %vm631 = vcmp.eq.f32.partialorder %v630, 8.507059e+37
    %v632 = vand.u32 %v620, 2147483648
    %v633 = vor.u32 1.1754944e-38, %v632
    %v634 = vsel %vm631, %v633, %v629
    %v635 = vmul.f32 1.0, %v634
    %v636 = vtanh.pop %v616
    %v637 = vmul.f32 %v635, %v501
    %639 = vrot.lane.b32.xlu0 %v636, 64
    %v640 = vpop.permute.xlu0 %639
    %v642 = vmul.f32 %v635, %v640
    %644 = vrot.lane.b32.xlu0 %v642, 32
    %v645 = vpop.permute.xlu0 %644
    %v647 = vadd.f32 %v637, %v645
    %v648 = vtanh.pop %v647
    %650 = vrot.lane.b32.xlu0 %v648, 64
    %v651 = vpop.permute.xlu0 %650
    %v653 = vmul.f32 %v635, %v651
    %655 = vrot.lane.b32.xlu0 %v595, 32
    %v656 = vpop.permute.xlu0 %655
    %v657 = vsel %vm147, %v656, 0
    %659 = vmatpush.msra.mxu0 0.0
    %660 = vmatpush.msra.mxu0 0.0
    %661 = vmatpush.msra.mxu0 0.0
    %662 = vmatpush.msra.mxu0 0.0
    %663 = vmatpush.msra.mxu0 0.0
    %664 = vmatpush.msra.mxu0 0.0
    %665 = vmatpush.msra.mxu0 0.0
    %666 = vmatpush.msra.mxu0 0.0
    %667 = vmatpush.msra.mxu0 0.0
    %668 = vmatpush.msra.mxu0 0.0
    %669 = vmatpush.msra.mxu0 0.0
    %670 = vmatpush.msra.mxu0 0.0
    %671 = vmatpush.msra.mxu0 %v56
    %672 = vmatpush.msra.mxu0 %v55
    %673 = vmatpush.msra.mxu0 %v54
    %674 = vmatpush.msra.mxu0 %v53
    %675 = vmatmul.f32.gmra.mxu0 %v657
    %v676 = vpop.f32.mrf.mxu0
    %v677 = vadd.f32 0.0, %v676
    %678 = vdwg.mxu0
    %680 = vrot.lane.b32.xlu0 %v653, 32
    %v681 = vpop.permute.xlu0 %680
    %v682 = vsel %vm147, %v681, 0
    %684 = vmatpush.msra.mxu0 0.0
    %685 = vmatpush.msra.mxu0 0.0
    %686 = vmatpush.msra.mxu0 0.0
    %687 = vmatpush.msra.mxu0 0.0
    %688 = vmatpush.msra.mxu0 0.0
    %689 = vmatpush.msra.mxu0 0.0
    %690 = vmatpush.msra.mxu0 0.0
    %691 = vmatpush.msra.mxu0 0.0
    %692 = vmatpush.msra.mxu0 0.0
    %693 = vmatpush.msra.mxu0 0.0
    %694 = vmatpush.msra.mxu0 0.0
    %695 = vmatpush.msra.mxu0 0.0
    %696 = vmatpush.msra.mxu0 %v52
    %697 = vmatpush.msra.mxu0 %v51
    %698 = vmatpush.msra.mxu0 %v50
    %699 = vmatpush.msra.mxu0 %v49
    %700 = vmatmul.f32.gmra.mxu0 %v682
    %v701 = vpop.f32.mrf.mxu0
    %v702 = vadd.f32 %v677, %v701
    %703 = vdwg.mxu0
    %v704 = vadd.f32 %v702, %v261
    %v705 = vxor.u32 %v704, 2147483648
    %v706 = vmul.f32 %v705, 1.442695
    %v707 = vpow.pop %v706
    %v708 = vadd.f32 %v707, 1.0
    %v709 = vrcp.pop %v708
    %v710 = vmul.f32 %v708, %v709
    %v711 = vsub.f32 1.0, %v710
    %v712 = vmul.f32 %v709, %v711
    %v713 = vadd.f32 %v709, %v712
    %vm714 = vweird.f32 %v708
    %vm715 = vweird.f32 %v709
    %vm716 = vmor %vm714, %vm715
    %v717 = vsel %vm716, %v709, %v713
    %v718 = vand.u32 2147483647, %v708
    %vm719 = vcmp.eq.f32.partialorder %v718, 8.507059e+37
    %v720 = vand.u32 %v708, 2147483648
    %v721 = vor.u32 1.1754944e-38, %v720
    %v722 = vsel %vm719, %v721, %v717
    %v723 = vmul.f32 1.0, %v722
    %v724 = vtanh.pop %v704
    %v725 = vmul.f32 %v723, %v589
    %727 = vrot.lane.b32.xlu0 %v724, 64
    %v728 = vpop.permute.xlu0 %727
    %v730 = vmul.f32 %v723, %v728
    %732 = vrot.lane.b32.xlu0 %v730, 32
    %v733 = vpop.permute.xlu0 %732
    %v735 = vadd.f32 %v725, %v733
    %v736 = vtanh.pop %v735
    %738 = vrot.lane.b32.xlu0 %v736, 64
    %v739 = vpop.permute.xlu0 %738
    %v741 = vmul.f32 %v723, %v739
    %742 = vmatpush.msra.mxu0 0.0
    %743 = vmatpush.msra.mxu0 0.0
    %744 = vmatpush.msra.mxu0 0.0
    %745 = vmatpush.msra.mxu0 0.0
    %746 = vmatpush.msra.mxu0 0.0
    %747 = vmatpush.msra.mxu0 0.0
    %748 = vmatpush.msra.mxu0 0.0
    %749 = vmatpush.msra.mxu0 0.0
    %750 = vmatpush.msra.mxu0 0.0
    %751 = vmatpush.msra.mxu0 0.0
    %752 = vmatpush.msra.mxu0 0.0
    %753 = vmatpush.msra.mxu0 0.0
    %754 = vmatpush.msra.mxu0 %v48
    %755 = vmatpush.msra.mxu0 %v47
    %756 = vmatpush.msra.mxu0 %v46
    %757 = vmatpush.msra.mxu0 %v45
    %758 = vmatmul.f32.gmra.mxu0 %v682
    %v759 = vpop.f32.mrf.mxu0
    %v760 = vadd.f32 0.0, %v759
    %761 = vdwg.mxu0
    %v762 = vadd.f32 %v109, %v760
    %v763 = vxor.u32 %v762, 2147483648
    %v764 = vmul.f32 %v763, 1.442695
    %v765 = vpow.pop %v764
    %v766 = vadd.f32 %v765, 1.0
    %v767 = vrcp.pop %v766
    %v768 = vmul.f32 %v766, %v767
    %v769 = vsub.f32 1.0, %v768
    %v770 = vmul.f32 %v767, %v769
    %v771 = vadd.f32 %v767, %v770
    %vm772 = vweird.f32 %v766
    %vm773 = vweird.f32 %v767
    %vm774 = vmor %vm772, %vm773
    %v775 = vsel %vm774, %v767, %v771
    %v776 = vand.u32 2147483647, %v766
    %vm777 = vcmp.eq.f32.partialorder %v776, 8.507059e+37
    %v778 = vand.u32 %v766, 2147483648
    %v779 = vor.u32 1.1754944e-38, %v778
    %v780 = vsel %vm777, %v779, %v775
    %v781 = vmul.f32 1.0, %v780
    %v782 = vtanh.pop %v762
    %v783 = vmul.f32 %v781, %v647
    %785 = vrot.lane.b32.xlu0 %v782, 64
    %v786 = vpop.permute.xlu0 %785
    %v788 = vmul.f32 %v781, %v786
    %790 = vrot.lane.b32.xlu0 %v788, 32
    %v791 = vpop.permute.xlu0 %790
    %v793 = vadd.f32 %v783, %v791
    %v794 = vtanh.pop %v793
    %796 = vrot.lane.b32.xlu0 %v794, 64
    %v797 = vpop.permute.xlu0 %796
    %v799 = vmul.f32 %v781, %v797
    %801 = vrot.lane.b32.xlu0 %v741, 32
    %v802 = vpop.permute.xlu0 %801
    %v803 = vsel %vm147, %v802, 0
    %805 = vmatpush.msra.mxu0 0.0
    %806 = vmatpush.msra.mxu0 0.0
    %807 = vmatpush.msra.mxu0 0.0
    %808 = vmatpush.msra.mxu0 0.0
    %809 = vmatpush.msra.mxu0 0.0
    %810 = vmatpush.msra.mxu0 0.0
    %811 = vmatpush.msra.mxu0 0.0
    %812 = vmatpush.msra.mxu0 0.0
    %813 = vmatpush.msra.mxu0 0.0
    %814 = vmatpush.msra.mxu0 0.0
    %815 = vmatpush.msra.mxu0 0.0
    %816 = vmatpush.msra.mxu0 0.0
    %817 = vmatpush.msra.mxu0 %v56
    %818 = vmatpush.msra.mxu0 %v55
    %819 = vmatpush.msra.mxu0 %v54
    %820 = vmatpush.msra.mxu0 %v53
    %821 = vmatmul.f32.gmra.mxu0 %v803
    %v822 = vpop.f32.mrf.mxu0
    %v823 = vadd.f32 0.0, %v822
    %824 = vdwg.mxu0
    %826 = vrot.lane.b32.xlu0 %v799, 32
    %v827 = vpop.permute.xlu0 %826
    %v828 = vsel %vm147, %v827, 0
    %830 = vmatpush.msra.mxu0 0.0
    %831 = vmatpush.msra.mxu0 0.0
    %832 = vmatpush.msra.mxu0 0.0
    %833 = vmatpush.msra.mxu0 0.0
    %834 = vmatpush.msra.mxu0 0.0
    %835 = vmatpush.msra.mxu0 0.0
    %836 = vmatpush.msra.mxu0 0.0
    %837 = vmatpush.msra.mxu0 0.0
    %838 = vmatpush.msra.mxu0 0.0
    %839 = vmatpush.msra.mxu0 0.0
    %840 = vmatpush.msra.mxu0 0.0
    %841 = vmatpush.msra.mxu0 0.0
    %842 = vmatpush.msra.mxu0 %v52
    %843 = vmatpush.msra.mxu0 %v51
    %844 = vmatpush.msra.mxu0 %v50
    %845 = vmatpush.msra.mxu0 %v49
    %846 = vmatmul.f32.gmra.mxu0 %v828
    %v847 = vpop.f32.mrf.mxu0
    %v848 = vadd.f32 %v823, %v847
    %849 = vdwg.mxu0
    %v850 = vadd.f32 %v848, %v261
    %v851 = vxor.u32 %v850, 2147483648
    %v852 = vmul.f32 %v851, 1.442695
    %v853 = vpow.pop %v852
    %v854 = vadd.f32 %v853, 1.0
    %v855 = vrcp.pop %v854
    %v856 = vmul.f32 %v854, %v855
    %v857 = vsub.f32 1.0, %v856
    %v858 = vmul.f32 %v855, %v857
    %v859 = vadd.f32 %v855, %v858
    %vm860 = vweird.f32 %v854
    %vm861 = vweird.f32 %v855
    %vm862 = vmor %vm860, %vm861
    %v863 = vsel %vm862, %v855, %v859
    %v864 = vand.u32 2147483647, %v854
    %vm865 = vcmp.eq.f32.partialorder %v864, 8.507059e+37
    %v866 = vand.u32 %v854, 2147483648
    %v867 = vor.u32 1.1754944e-38, %v866
    %v868 = vsel %vm865, %v867, %v863
    %v869 = vmul.f32 1.0, %v868
    %v870 = vtanh.pop %v850
    %v871 = vmul.f32 %v869, %v735
    %873 = vrot.lane.b32.xlu0 %v870, 64
    %v874 = vpop.permute.xlu0 %873
    %v876 = vmul.f32 %v869, %v874
    %878 = vrot.lane.b32.xlu0 %v876, 32
    %v879 = vpop.permute.xlu0 %878
    %v881 = vadd.f32 %v871, %v879
    %v882 = vtanh.pop %v881
    %884 = vrot.lane.b32.xlu0 %v882, 64
    %v885 = vpop.permute.xlu0 %884
    %v887 = vmul.f32 %v869, %v885
    %888 = vmatpush.msra.mxu0 0.0
    %889 = vmatpush.msra.mxu0 0.0
    %890 = vmatpush.msra.mxu0 0.0
    %891 = vmatpush.msra.mxu0 0.0
    %892 = vmatpush.msra.mxu0 0.0
    %893 = vmatpush.msra.mxu0 0.0
    %894 = vmatpush.msra.mxu0 0.0
    %895 = vmatpush.msra.mxu0 0.0
    %896 = vmatpush.msra.mxu0 0.0
    %897 = vmatpush.msra.mxu0 0.0
    %898 = vmatpush.msra.mxu0 0.0
    %899 = vmatpush.msra.mxu0 0.0
    %900 = vmatpush.msra.mxu0 %v48
    %901 = vmatpush.msra.mxu0 %v47
    %902 = vmatpush.msra.mxu0 %v46
    %903 = vmatpush.msra.mxu0 %v45
    %904 = vmatmul.f32.gmra.mxu0 %v828
    %v905 = vpop.f32.mrf.mxu0
    %v906 = vadd.f32 0.0, %v905
    %907 = vdwg.mxu0
    %v908 = vadd.f32 %v119, %v906
    %v909 = vxor.u32 %v908, 2147483648
    %v910 = vmul.f32 %v909, 1.442695
    %v911 = vpow.pop %v910
    %v912 = vadd.f32 %v911, 1.0
    %v913 = vrcp.pop %v912
    %v914 = vmul.f32 %v912, %v913
    %v915 = vsub.f32 1.0, %v914
    %v916 = vmul.f32 %v913, %v915
    %v917 = vadd.f32 %v913, %v916
    %vm918 = vweird.f32 %v912
    %vm919 = vweird.f32 %v913
    %vm920 = vmor %vm918, %vm919
    %v921 = vsel %vm920, %v913, %v917
    %v922 = vand.u32 2147483647, %v912
    %vm923 = vcmp.eq.f32.partialorder %v922, 8.507059e+37
    %v924 = vand.u32 %v912, 2147483648
    %v925 = vor.u32 1.1754944e-38, %v924
    %v926 = vsel %vm923, %v925, %v921
    %v927 = vmul.f32 1.0, %v926
    %v928 = vtanh.pop %v908
    %v929 = vmul.f32 %v927, %v793
    %931 = vrot.lane.b32.xlu0 %v928, 64
    %v932 = vpop.permute.xlu0 %931
    %v934 = vmul.f32 %v927, %v932
    %936 = vrot.lane.b32.xlu0 %v934, 32
    %v937 = vpop.permute.xlu0 %936
    %v939 = vadd.f32 %v929, %v937
    %v940 = vtanh.pop %v939
    %942 = vrot.lane.b32.xlu0 %v940, 64
    %v943 = vpop.permute.xlu0 %942
    %v945 = vmul.f32 %v927, %v943
    %947 = vrot.lane.b32.xlu0 %v887, 32
    %v948 = vpop.permute.xlu0 %947
    %v949 = vsel %vm147, %v948, 0
    %951 = vmatpush.msra.mxu0 0.0
    %952 = vmatpush.msra.mxu0 0.0
    %953 = vmatpush.msra.mxu0 0.0
    %954 = vmatpush.msra.mxu0 0.0
    %955 = vmatpush.msra.mxu0 0.0
    %956 = vmatpush.msra.mxu0 0.0
    %957 = vmatpush.msra.mxu0 0.0
    %958 = vmatpush.msra.mxu0 0.0
    %959 = vmatpush.msra.mxu0 0.0
    %960 = vmatpush.msra.mxu0 0.0
    %961 = vmatpush.msra.mxu0 0.0
    %962 = vmatpush.msra.mxu0 0.0
    %963 = vmatpush.msra.mxu0 %v56
    %964 = vmatpush.msra.mxu0 %v55
    %965 = vmatpush.msra.mxu0 %v54
    %966 = vmatpush.msra.mxu0 %v53
    %967 = vmatmul.f32.gmra.mxu0 %v949
    %v968 = vpop.f32.mrf.mxu0
    %v969 = vadd.f32 0.0, %v968
    %970 = vdwg.mxu0
    %972 = vrot.lane.b32.xlu0 %v945, 32
    %v973 = vpop.permute.xlu0 %972
    %v974 = vsel %vm147, %v973, 0
    %976 = vmatpush.msra.mxu0 0.0
    %977 = vmatpush.msra.mxu0 0.0
    %978 = vmatpush.msra.mxu0 0.0
    %979 = vmatpush.msra.mxu0 0.0
    %980 = vmatpush.msra.mxu0 0.0
    %981 = vmatpush.msra.mxu0 0.0
    %982 = vmatpush.msra.mxu0 0.0
    %983 = vmatpush.msra.mxu0 0.0
    %984 = vmatpush.msra.mxu0 0.0
    %985 = vmatpush.msra.mxu0 0.0
    %986 = vmatpush.msra.mxu0 0.0
    %987 = vmatpush.msra.mxu0 0.0
    %988 = vmatpush.msra.mxu0 %v52
    %989 = vmatpush.msra.mxu0 %v51
    %990 = vmatpush.msra.mxu0 %v50
    %991 = vmatpush.msra.mxu0 %v49
    %992 = vmatmul.f32.gmra.mxu0 %v974
    %v993 = vpop.f32.mrf.mxu0
    %v994 = vadd.f32 %v969, %v993
    %995 = vdwg.mxu0
    %v996 = vadd.f32 %v994, %v261
    %v997 = vxor.u32 %v996, 2147483648
    %v998 = vmul.f32 %v997, 1.442695
    %v999 = vpow.pop %v998
    %v1000 = vadd.f32 %v999, 1.0
    %v1001 = vrcp.pop %v1000
    %v1002 = vmul.f32 %v1000, %v1001
    %v1003 = vsub.f32 1.0, %v1002
    %v1004 = vmul.f32 %v1001, %v1003
    %v1005 = vadd.f32 %v1001, %v1004
    %vm1006 = vweird.f32 %v1000
    %vm1007 = vweird.f32 %v1001
    %vm1008 = vmor %vm1006, %vm1007
    %v1009 = vsel %vm1008, %v1001, %v1005
    %v1010 = vand.u32 2147483647, %v1000
    %vm1011 = vcmp.eq.f32.partialorder %v1010, 8.507059e+37
    %v1012 = vand.u32 %v1000, 2147483648
    %v1013 = vor.u32 1.1754944e-38, %v1012
    %v1014 = vsel %vm1011, %v1013, %v1009
    %v1015 = vmul.f32 1.0, %v1014
    %v1016 = vtanh.pop %v996
    %v1017 = vmul.f32 %v1015, %v881
    %1019 = vrot.lane.b32.xlu0 %v1016, 64
    %v1020 = vpop.permute.xlu0 %1019
    %v1022 = vmul.f32 %v1015, %v1020
    %1024 = vrot.lane.b32.xlu0 %v1022, 32
    %v1025 = vpop.permute.xlu0 %1024
    %v1027 = vadd.f32 %v1017, %v1025
    %v1028 = vtanh.pop %v1027
    %1030 = vrot.lane.b32.xlu0 %v1028, 64
    %v1031 = vpop.permute.xlu0 %1030
    %v1033 = vmul.f32 %v1015, %v1031
    %1034 = vmatpush.msra.mxu0 0.0
    %1035 = vmatpush.msra.mxu0 0.0
    %1036 = vmatpush.msra.mxu0 0.0
    %1037 = vmatpush.msra.mxu0 0.0
    %1038 = vmatpush.msra.mxu0 0.0
    %1039 = vmatpush.msra.mxu0 0.0
    %1040 = vmatpush.msra.mxu0 0.0
    %1041 = vmatpush.msra.mxu0 0.0
    %1042 = vmatpush.msra.mxu0 0.0
    %1043 = vmatpush.msra.mxu0 0.0
    %1044 = vmatpush.msra.mxu0 0.0
    %1045 = vmatpush.msra.mxu0 0.0
    %1046 = vmatpush.msra.mxu0 %v48
    %1047 = vmatpush.msra.mxu0 %v47
    %1048 = vmatpush.msra.mxu0 %v46
    %1049 = vmatpush.msra.mxu0 %v45
    %1050 = vmatmul.f32.gmra.mxu0 %v974
    %v1051 = vpop.f32.mrf.mxu0
    %v1052 = vadd.f32 0.0, %v1051
    %1053 = vdwg.mxu0
    %v1054 = vadd.f32 %v129, %v1052
    %v1055 = vxor.u32 %v1054, 2147483648
    %v1056 = vmul.f32 %v1055, 1.442695
    %v1057 = vpow.pop %v1056
    %v1058 = vadd.f32 %v1057, 1.0
    %v1059 = vrcp.pop %v1058
    %v1060 = vmul.f32 %v1058, %v1059
    %v1061 = vsub.f32 1.0, %v1060
    %v1062 = vmul.f32 %v1059, %v1061
    %v1063 = vadd.f32 %v1059, %v1062
    %vm1064 = vweird.f32 %v1058
    %vm1065 = vweird.f32 %v1059
    %vm1066 = vmor %vm1064, %vm1065
    %v1067 = vsel %vm1066, %v1059, %v1063
    %v1068 = vand.u32 2147483647, %v1058
    %vm1069 = vcmp.eq.f32.partialorder %v1068, 8.507059e+37
    %v1070 = vand.u32 %v1058, 2147483648
    %v1071 = vor.u32 1.1754944e-38, %v1070
    %v1072 = vsel %vm1069, %v1071, %v1067
    %v1073 = vmul.f32 1.0, %v1072
    %v1074 = vtanh.pop %v1054
    %v1075 = vmul.f32 %v1073, %v939
    %1077 = vrot.lane.b32.xlu0 %v1074, 64
    %v1078 = vpop.permute.xlu0 %1077
    %v1080 = vmul.f32 %v1073, %v1078
    %1082 = vrot.lane.b32.xlu0 %v1080, 32
    %v1083 = vpop.permute.xlu0 %1082
    %v1085 = vadd.f32 %v1075, %v1083
    %v1086 = vtanh.pop %v1085
    %1088 = vrot.lane.b32.xlu0 %v1086, 64
    %v1089 = vpop.permute.xlu0 %1088
    %v1091 = vmul.f32 %v1073, %v1089
    %1093 = vrot.lane.b32.xlu0 %v1033, 32
    %v1094 = vpop.permute.xlu0 %1093
    %v1095 = vsel %vm147, %v1094, 0
    %1097 = vmatpush.msra.mxu0 0.0
    %1098 = vmatpush.msra.mxu0 0.0
    %1099 = vmatpush.msra.mxu0 0.0
    %1100 = vmatpush.msra.mxu0 0.0
    %1101 = vmatpush.msra.mxu0 0.0
    %1102 = vmatpush.msra.mxu0 0.0
    %1103 = vmatpush.msra.mxu0 0.0
    %1104 = vmatpush.msra.mxu0 0.0
    %1105 = vmatpush.msra.mxu0 0.0
    %1106 = vmatpush.msra.mxu0 0.0
    %1107 = vmatpush.msra.mxu0 0.0
    %1108 = vmatpush.msra.mxu0 0.0
    %1109 = vmatpush.msra.mxu0 %v56
    %1110 = vmatpush.msra.mxu0 %v55
    %1111 = vmatpush.msra.mxu0 %v54
    %1112 = vmatpush.msra.mxu0 %v53
    %1113 = vmatmul.f32.gmra.mxu0 %v1095
    %v1114 = vpop.f32.mrf.mxu0
    %v1115 = vadd.f32 0.0, %v1114
    %1116 = vdwg.mxu0
    %1118 = vrot.lane.b32.xlu0 %v1091, 32
    %v1119 = vpop.permute.xlu0 %1118
    %v1120 = vsel %vm147, %v1119, 0
    %1122 = vmatpush.msra.mxu0 0.0
    %1123 = vmatpush.msra.mxu0 0.0
    %1124 = vmatpush.msra.mxu0 0.0
    %1125 = vmatpush.msra.mxu0 0.0
    %1126 = vmatpush.msra.mxu0 0.0
    %1127 = vmatpush.msra.mxu0 0.0
    %1128 = vmatpush.msra.mxu0 0.0
    %1129 = vmatpush.msra.mxu0 0.0
    %1130 = vmatpush.msra.mxu0 0.0
    %1131 = vmatpush.msra.mxu0 0.0
    %1132 = vmatpush.msra.mxu0 0.0
    %1133 = vmatpush.msra.mxu0 0.0
    %1134 = vmatpush.msra.mxu0 %v52
    %1135 = vmatpush.msra.mxu0 %v51
    %1136 = vmatpush.msra.mxu0 %v50
    %1137 = vmatpush.msra.mxu0 %v49
    %1138 = vmatmul.f32.gmra.mxu0 %v1120
    %v1139 = vpop.f32.mrf.mxu0
    %v1140 = vadd.f32 %v1115, %v1139
    %1141 = vdwg.mxu0
    %v1142 = vadd.f32 %v1140, %v261
    %v1143 = vxor.u32 %v1142, 2147483648
    %v1144 = vmul.f32 %v1143, 1.442695
    %v1145 = vpow.pop %v1144
    %v1146 = vadd.f32 %v1145, 1.0
    %v1147 = vrcp.pop %v1146
    %v1148 = vmul.f32 %v1146, %v1147
    %v1149 = vsub.f32 1.0, %v1148
    %v1150 = vmul.f32 %v1147, %v1149
    %v1151 = vadd.f32 %v1147, %v1150
    %vm1152 = vweird.f32 %v1146
    %vm1153 = vweird.f32 %v1147
    %vm1154 = vmor %vm1152, %vm1153
    %v1155 = vsel %vm1154, %v1147, %v1151
    %v1156 = vand.u32 2147483647, %v1146
    %vm1157 = vcmp.eq.f32.partialorder %v1156, 8.507059e+37
    %v1158 = vand.u32 %v1146, 2147483648
    %v1159 = vor.u32 1.1754944e-38, %v1158
    %v1160 = vsel %vm1157, %v1159, %v1155
    %v1161 = vmul.f32 1.0, %v1160
    %v1162 = vtanh.pop %v1142
    %v1163 = vmul.f32 %v1161, %v1027
    %1165 = vrot.lane.b32.xlu0 %v1162, 64
    %v1166 = vpop.permute.xlu0 %1165
    %v1168 = vmul.f32 %v1161, %v1166
    %1170 = vrot.lane.b32.xlu0 %v1168, 32
    %v1171 = vpop.permute.xlu0 %1170
    %v1173 = vadd.f32 %v1163, %v1171
    %v1174 = vtanh.pop %v1173
    %1176 = vrot.lane.b32.xlu0 %v1174, 64
    %v1177 = vpop.permute.xlu0 %1176
    %v1179 = vmul.f32 %v1161, %v1177
    %1180 = vmatpush.msra.mxu0 0.0
    %1181 = vmatpush.msra.mxu0 0.0
    %1182 = vmatpush.msra.mxu0 0.0
    %1183 = vmatpush.msra.mxu0 0.0
    %1184 = vmatpush.msra.mxu0 0.0
    %1185 = vmatpush.msra.mxu0 0.0
    %1186 = vmatpush.msra.mxu0 0.0
    %1187 = vmatpush.msra.mxu0 0.0
    %1188 = vmatpush.msra.mxu0 0.0
    %1189 = vmatpush.msra.mxu0 0.0
    %1190 = vmatpush.msra.mxu0 0.0
    %1191 = vmatpush.msra.mxu0 0.0
    %1192 = vmatpush.msra.mxu0 %v48
    %1193 = vmatpush.msra.mxu0 %v47
    %1194 = vmatpush.msra.mxu0 %v46
    %1195 = vmatpush.msra.mxu0 %v45
    %1196 = vmatmul.f32.gmra.mxu0 %v1120
    %v1197 = vpop.f32.mrf.mxu0
    %v1198 = vadd.f32 0.0, %v1197
    %1199 = vdwg.mxu0
    %v1200 = vadd.f32 %v139, %v1198
    %v1201 = vxor.u32 %v1200, 2147483648
    %v1202 = vmul.f32 %v1201, 1.442695
    %v1203 = vpow.pop %v1202
    %v1204 = vadd.f32 %v1203, 1.0
    %v1205 = vrcp.pop %v1204
    %v1206 = vmul.f32 %v1204, %v1205
    %v1207 = vsub.f32 1.0, %v1206
    %v1208 = vmul.f32 %v1205, %v1207
    %v1209 = vadd.f32 %v1205, %v1208
    %vm1210 = vweird.f32 %v1204
    %vm1211 = vweird.f32 %v1205
    %vm1212 = vmor %vm1210, %vm1211
    %v1213 = vsel %vm1212, %v1205, %v1209
    %v1214 = vand.u32 2147483647, %v1204
    %vm1215 = vcmp.eq.f32.partialorder %v1214, 8.507059e+37
    %v1216 = vand.u32 %v1204, 2147483648
    %v1217 = vor.u32 1.1754944e-38, %v1216
    %v1218 = vsel %vm1215, %v1217, %v1213
    %v1219 = vmul.f32 1.0, %v1218
    %v1220 = vtanh.pop %v1200
    %v1221 = vmul.f32 %v1219, %v1085
    %1223 = vrot.lane.b32.xlu0 %v1220, 64
    %v1224 = vpop.permute.xlu0 %1223
    %v1226 = vmul.f32 %v1219, %v1224
    %1228 = vrot.lane.b32.xlu0 %v1226, 32
    %v1229 = vpop.permute.xlu0 %1228
    %v1231 = vadd.f32 %v1221, %v1229
    %v1232 = vtanh.pop %v1231
    %1234 = vrot.lane.b32.xlu0 %v1232, 64
    %v1235 = vpop.permute.xlu0 %1234
    %v1237 = vmul.f32 %v1219, %v1235
    %1239 = vrot.lane.b32.xlu0 %v1179, 32
    %v1240 = vpop.permute.xlu0 %1239
    %v1241 = vsel %vm147, %v1240, 0
    %1243 = vmatpush.msra.mxu0 0.0
    %1244 = vmatpush.msra.mxu0 0.0
    %1245 = vmatpush.msra.mxu0 0.0
    %1246 = vmatpush.msra.mxu0 0.0
    %1247 = vmatpush.msra.mxu0 0.0
    %1248 = vmatpush.msra.mxu0 0.0
    %1249 = vmatpush.msra.mxu0 0.0
    %1250 = vmatpush.msra.mxu0 0.0
    %1251 = vmatpush.msra.mxu0 0.0
    %1252 = vmatpush.msra.mxu0 0.0
    %1253 = vmatpush.msra.mxu0 0.0
    %1254 = vmatpush.msra.mxu0 0.0
    %1255 = vmatpush.msra.mxu0 %v56
    %1256 = vmatpush.msra.mxu0 %v55
    %1257 = vmatpush.msra.mxu0 %v54
    %1258 = vmatpush.msra.mxu0 %v53
    %1259 = vmatmul.f32.gmra.mxu0 %v1241
    %v1260 = vpop.f32.mrf.mxu0
    %v1261 = vadd.f32 0.0, %v1260
    %1262 = vdwg.mxu0
    %1264 = vrot.lane.b32.xlu0 %v1237, 32
    %v1265 = vpop.permute.xlu0 %1264
    %v1266 = vsel %vm147, %v1265, 0
    %1268 = vmatpush.msra.mxu0 0.0
    %1269 = vmatpush.msra.mxu0 0.0
    %1270 = vmatpush.msra.mxu0 0.0
    %1271 = vmatpush.msra.mxu0 0.0
    %1272 = vmatpush.msra.mxu0 0.0
    %1273 = vmatpush.msra.mxu0 0.0
    %1274 = vmatpush.msra.mxu0 0.0
    %1275 = vmatpush.msra.mxu0 0.0
    %1276 = vmatpush.msra.mxu0 0.0
    %1277 = vmatpush.msra.mxu0 0.0
    %1278 = vmatpush.msra.mxu0 0.0
    %1279 = vmatpush.msra.mxu0 0.0
    %1280 = vmatpush.msra.mxu0 %v52
    %1281 = vmatpush.msra.mxu0 %v51
    %1282 = vmatpush.msra.mxu0 %v50
    %1283 = vmatpush.msra.mxu0 %v49
    %1284 = vmatmul.f32.gmra.mxu0 %v1266
    %v1285 = vpop.f32.mrf.mxu0
    %v1286 = vadd.f32 %v1261, %v1285
    %1287 = vdwg.mxu0
    %v1288 = vadd.f32 %v1286, %v261
    %v1289 = vxor.u32 %v1288, 2147483648
    %v1290 = vmul.f32 %v1289, 1.442695
    %v1291 = vpow.pop %v1290
    %v1292 = vadd.f32 %v1291, 1.0
    %v1293 = vrcp.pop %v1292
    %v1294 = vmul.f32 %v1292, %v1293
    %v1295 = vsub.f32 1.0, %v1294
    %v1296 = vmul.f32 %v1293, %v1295
    %v1297 = vadd.f32 %v1293, %v1296
    %vm1298 = vweird.f32 %v1292
    %vm1299 = vweird.f32 %v1293
    %vm1300 = vmor %vm1298, %vm1299
    %v1301 = vsel %vm1300, %v1293, %v1297
    %v1302 = vand.u32 2147483647, %v1292
    %vm1303 = vcmp.eq.f32.partialorder %v1302, 8.507059e+37
    %v1304 = vand.u32 %v1292, 2147483648
    %v1305 = vor.u32 1.1754944e-38, %v1304
    %v1306 = vsel %vm1303, %v1305, %v1301
    %v1307 = vmul.f32 1.0, %v1306
    %v1308 = vtanh.pop %v1288
    %v1309 = vmul.f32 %v1307, %v1173
    %1311 = vrot.lane.b32.xlu0 %v1308, 64
    %v1312 = vpop.permute.xlu0 %1311
    %v1314 = vmul.f32 %v1307, %v1312
    %1316 = vrot.lane.b32.xlu0 %v1314, 32
    %v1317 = vpop.permute.xlu0 %1316
    %v1319 = vadd.f32 %v1309, %v1317
    %v1320 = vtanh.pop %v1319
    %1322 = vrot.lane.b32.xlu0 %v1320, 64
    %v1323 = vpop.permute.xlu0 %1322
    %v1325 = vmul.f32 %v1307, %v1323
    %v1326 = vperm.slane %v58, 0
    %1328 = vrot.lane.b32.xlu0 %v1326, 96
    %v1329 = vpop.permute.xlu0 %1328
    %v1331 = vmul.f32 %v1325, %v1329
    %1333 = vrot.lane.b32.xlu0 %v1331, 32
    %v1334 = vpop.permute.xlu0 %1333
    %vm1336 = vcmask 254976
    %v1337 = vsel %vm1336, %v1334, 0.0
    %1338 = vadd.xlane.f32.xlu0 %v1337
    %v1339 = vpop.xlane.xlu0 %1338
    %v1340 = vadd.f32 %v1339, %v1326
    %v1341 = vxor.u32 %v1340, 2147483648
    %v1342 = vmul.f32 %v1341, 1.442695
    %v1343 = vpow.pop %v1342
    %v1344 = vadd.f32 %v1343, 1.0
    %v1345 = vrcp.pop %v1344
    %v1346 = vmul.f32 %v1344, %v1345
    %v1347 = vsub.f32 1.0, %v1346
    %v1348 = vmul.f32 %v1345, %v1347
    %v1349 = vadd.f32 %v1345, %v1348
    %vm1350 = vweird.f32 %v1344
    %vm1351 = vweird.f32 %v1345
    %vm1352 = vmor %vm1350, %vm1351
    %v1353 = vsel %vm1352, %v1345, %v1349
    %v1354 = vand.u32 2147483647, %v1344
    %vm1355 = vcmp.eq.f32.partialorder %v1354, 8.507059e+37
    %v1356 = vand.u32 %v1344, 2147483648
    %v1357 = vor.u32 1.1754944e-38, %v1356
    %v1358 = vsel %vm1355, %v1357, %v1353
    %v1359 = vmul.f32 1.0, %v1358
    %1361 = vrot.lane.b32.xlu0 %v1359, 96
    %v1362 = vpop.permute.xlu0 %1361
    %vm1364 = vcmask 1024
    %1365 = vst.msk [vmem:[%s3] sm:$0x3] %vm1364, %v1362
    %1367 = vst.msk [vmem:[%s4] sm:$0x3] %vm1336, %v1265
    %1369 = vrot.lane.b32.xlu0 %v1231, 96
    %v1370 = vpop.permute.xlu0 %1369
    %s1372 = scalar_lea.vmem %s4, 4
    %1373 = vst.msk [vmem:[%s1372] sm:$0x3] %vm1336, %v1370
    %1375 = vrot.lane.b32.xlu0 %v1325, 32
    %v1376 = vpop.permute.xlu0 %1375
    %s1378 = scalar_lea.vmem %s4, 2
    %1379 = vst.msk [vmem:[%s1378] sm:$0x3] %vm1336, %v1376
    %1381 = vrot.lane.b32.xlu0 %v1319, 96
    %v1382 = vpop.permute.xlu0 %1381
    %s1384 = scalar_lea.vmem %s4, 6
    %1385 = vst.msk [vmem:[%s1384] sm:$0x3] %vm1336, %v1382
    // Predicated region
    $region22: #{tpu_custom_call.1} parent=1 // pred_check
      _
    $region23: #{tpu_custom_call.1} parent=1 // pred_check_branch
      %1387 = sbr.rel (0) target = $region25
    $region24: #{tpu_custom_call.1} parent=1 // pred_region
      _
    $region25: #{tpu_custom_call.1} parent=1 // pred_fallthru
      _
    // Predicated region
    $region26: #{tpu_custom_call.1} parent=1 // pred_check
      _
    $region27: #{tpu_custom_call.1} parent=1 // pred_check_branch
      %1389 = sbr.rel (0) target = $region29
    $region28: #{tpu_custom_call.1} parent=1 // pred_region
      _
    $region29: #{tpu_custom_call.1} parent=1 // pred_fallthru
      _
    // Predicated region
    $region30: #{tpu_custom_call.1} parent=1 // pred_check
      _
    $region31: #{tpu_custom_call.1} parent=1 // pred_check_branch
      %1391 = sbr.rel (0) target = $region33
    $region32: #{tpu_custom_call.1} parent=1 // pred_region
      _
    $region33: #{tpu_custom_call.1} parent=1 // pred_fallthru
      _
    // Predicated region
    $region34: #{tpu_custom_call.1} parent=1 // pred_check
      _
    $region35: #{tpu_custom_call.1} parent=1 // pred_check_branch
      %1393 = sbr.rel (0) target = $region37
    $region36: #{tpu_custom_call.1} parent=1 // pred_region
      _
    $region37: #{tpu_custom_call.1} parent=1 // pred_fallthru
      _
    %1394 = vsyncpa [#allocation3], 1
    %1395 = vsyncpa [#allocation4], 1

</llo_original>
